<compile_context>
chip_gen: v5e
topology: v5e:2x2
jax: 0.10.0
libtpu: 0.0.40
codegen_flags: <defaults>
</compile_context>

<pallas_src>
import functools
import math

import jax
import jax.numpy as jnp
from jax.experimental import pallas as pl
from jax.experimental.pallas import tpu as pltpu

_NEG_INF = -1e30   # finite mask constant: no (-inf)-(-inf) NaN hazard


# ---------------------------------------------------------------------------
# Generation-aware configuration
# ---------------------------------------------------------------------------
def _tpu_config():
    """Best-effort (vmem_limit_bytes, bf16_exp_ok) for the local TPU."""
    kind = ""
    try:
        kind = jax.devices()[0].device_kind.lower()
    except Exception:
        pass
    vmem_phys = 128 * 1024 * 1024
    try:
        vmem_phys = int(pltpu.get_tpu_info().vmem_capacity_bytes)
    except Exception:
        if "v7" in kind:
            vmem_phys = 64 * 1024 * 1024
    # Request ~75% of physical: leaves headroom for Mosaic internal scratch.
    vmem_limit = int(vmem_phys * 0.75)
    if "v7" in kind:                              # 64 MiB / TC part
        vmem_limit = min(vmem_limit, 48 * 1024 * 1024)
    vmem_limit = min(vmem_limit, 100 * 1024 * 1024)
    # bf16 EUP exists on v6e / v7x only; keep f32 exp elsewhere (and if the
    # device kind could not be determined).
    bf16_exp = ("v6" in kind) or ("v7" in kind)
    return vmem_limit, bf16_exp


def _row_tile(T, C, n_head, vmem_limit):
    """Largest row tile (of 512/256/128 dividing T) whose attention working set
    fits comfortably under the scoped-VMEM budget; falls back to full T."""
    dh = C // n_head

    def est_bytes(t):
        q_blk = 2 * t * C * 2                      # double-buffered bf16 q tile
        kv_blk = 2 * t * 2 * C * 2                 # double-buffered bf16 kv tile
        o_blk = 2 * t * C * 4                      # double-buffered f32 out tile
        weights = 2 * C * C * 2 + C * 4            # Wp bf16 (x2 bufs) + bias
        scratch = n_head * t * (max(dh, 128) + 2 * 128) * 4   # acc + m + l (padded)
        interm = 3 * t * t * 4                     # scores / probs / mask bias
        return q_blk + kv_blk + o_blk + weights + scratch + interm

    divisors = [t for t in (512, 256, 128) if T % t == 0]
    for t in divisors:
        if est_bytes(t) <= int(0.6 * vmem_limit):
            return t
    return divisors[-1] if divisors else T


# ---------------------------------------------------------------------------
# Kernel 1: fused QKV projection
# ---------------------------------------------------------------------------
def _qkv_proj_kernel(x_ref, w_ref, b_ref, q_ref, kv_ref, *, embed_dim):
    x = x_ref[0].astype(jnp.bfloat16)                       # (Tt, C)
    # One wide MXU matmul (N = 3C): bf16 operands, f32 accumulation.
    qkv = jnp.dot(x, w_ref[...], preferred_element_type=jnp.float32)
    qkv = qkv + b_ref[...]                                  # f32 bias (1, 3C)
    q_ref[0] = qkv[:, :embed_dim].astype(q_ref.dtype)
    kv_ref[0] = qkv[:, embed_dim:].astype(kv_ref.dtype)


def _qkv_projection(x, w_qkv, b_qkv, row_tile, vmem_limit):
    B, T, C = x.shape
    grid = (B, T // row_tile)
    return pl.pallas_call(
        functools.partial(_qkv_proj_kernel, embed_dim=C),
        out_shape=(jax.ShapeDtypeStruct((B, T, C), jnp.bfloat16),
                   jax.ShapeDtypeStruct((B, T, 2 * C), jnp.bfloat16)),
        grid_spec=pltpu.PrefetchScalarGridSpec(
            num_scalar_prefetch=0,
            grid=grid,
            in_specs=[
                pl.BlockSpec((1, row_tile, C), lambda b, t: (b, t, 0)),     # x tile
                pl.BlockSpec((C, 3 * C), lambda b, t: (0, 0)),              # fused W
                pl.BlockSpec((1, 3 * C), lambda b, t: (0, 0)),              # fused b
            ],
            out_specs=[
                pl.BlockSpec((1, row_tile, C), lambda b, t: (b, t, 0)),     # q
                pl.BlockSpec((1, row_tile, 2 * C), lambda b, t: (b, t, 0)), # k|v
            ],
        ),
        compiler_params=pltpu.CompilerParams(
            dimension_semantics=("parallel", "parallel"),
            vmem_limit_bytes=vmem_limit),
    )(x, w_qkv, b_qkv)


# ---------------------------------------------------------------------------
# Kernel 2: streaming (flash-style) causal attention + fused output projection
# grid = (batch, q-tiles, kv-tiles); kv axis is the reduction ("arbitrary")
# ---------------------------------------------------------------------------
def _attn_kernel(q_ref, kv_ref, wp_ref, bp_ref, o_ref,
                 m_ref, l_ref, acc_ref, *, n_head, q_tile, scale, exp_bf16):
    qi = pl.program_id(1)
    ki = pl.program_id(2)
    nk = pl.num_programs(2)

    @pl.when(ki == 0)
    def _init():
        m_ref[...] = jnp.full_like(m_ref, _NEG_INF)
        l_ref[...] = jnp.zeros_like(l_ref)
        acc_ref[...] = jnp.zeros_like(acc_ref)

    # Causal skip: KV blocks strictly above the diagonal contribute nothing
    # (their DMA is also suppressed by the clamped index_map).
    @pl.when(ki <= qi)
    def _update():
        q_blk = q_ref[0]                                    # (Tq, C)  bf16
        kv_blk = kv_ref[0]                                  # (Tk, 2C) bf16
        Tq, C = q_blk.shape
        Tk = kv_blk.shape[0]
        Dh = C // n_head
        k_all = kv_blk[:, :C]
        v_all = kv_blk[:, C:]

        # Causal additive bias for this (q-tile, kv-tile) block, hoisted out
        # of the head loop (all zeros for blocks below the diagonal).
        q_pos = qi * q_tile + jax.lax.broadcasted_iota(jnp.int32, (Tq, Tk), 0)
        k_pos = ki * q_tile + jax.lax.broadcasted_iota(jnp.int32, (Tq, Tk), 1)
        mask_bias = jnp.where(k_pos <= q_pos, 0.0, _NEG_INF).astype(jnp.float32)

        # Static per-head loop over lane slices of the lane-dense (Tq, C) /
        # (Tk, 2C) tiles (no (T, H, Dh) relayouts in the hot loop).
        for h in range(n_head):
            sl = slice(h * Dh, (h + 1) * Dh)
            q_h = q_blk[:, sl]                              # (Tq, Dh) bf16
            k_h = k_all[:, sl]                              # (Tk, Dh) bf16
            v_h = v_all[:, sl]                              # (Tk, Dh) bf16

            # Scores (Tq, Tk): contract last dims of both sides (no explicit
            # k^T materialized); bf16 operands, f32 MXU accumulation.
            s = jax.lax.dot_general(
                q_h, k_h, (((1,), (1,)), ((), ())),
                preferred_element_type=jnp.float32) * scale
            s = s + mask_bias

            # Online softmax update (per head running max / sum / PV acc).
            m_prev = m_ref[h]                               # (Tq, 1) f32
            m_new = jnp.maximum(m_prev, jnp.max(s, axis=-1, keepdims=True))
            alpha = jnp.exp(m_prev - m_new)                 # (Tq, 1) f32
            if exp_bf16:
                # bf16 EUP on v6e/v7x; p feeds the MXU in bf16 anyway.
                p = jnp.exp((s - m_new).astype(jnp.bfloat16))
                row_sum = jnp.sum(p, axis=-1, keepdims=True, dtype=jnp.float32)
            else:
                p_f32 = jnp.exp(s - m_new)
                row_sum = jnp.sum(p_f32, axis=-1, keepdims=True)
                p = p_f32.astype(jnp.bfloat16)

            l_ref[h] = alpha * l_ref[h] + row_sum
            acc_ref[h] = alpha * acc_ref[h] + jnp.dot(
                p, v_h, preferred_element_type=jnp.float32)  # (Tq, Dh) f32
            m_ref[h] = m_new

    @pl.when(ki == nk - 1)
    def _finalize():
        C = q_ref.shape[-1]
        Dh = C // n_head
        # Deferred normalization per head, then ONE (Tq,C)@(C,C) projection
        # matmul (K = C fills the MXU; no per-head f32 accumulator RMW).
        ys = []
        for h in range(n_head):
            inv_l = pl.reciprocal(l_ref[h], approx=False)    # EUP, near-free
            ys.append((acc_ref[h] * inv_l).astype(jnp.bfloat16))
        y = jnp.concatenate(ys, axis=-1)                     # (Tq, C) bf16
        out = jnp.dot(y, wp_ref[...], preferred_element_type=jnp.float32)
        out = out + bp_ref[...]                              # (1, C) f32 bias
        o_ref[0] = out.astype(o_ref.dtype)


def _attention(q, kv, wp, bp, *, n_head, q_tile, out_dtype, vmem_limit, exp_bf16):
    B, T, C = q.shape
    nq = T // q_tile
    nk = T // q_tile
    dh = C // n_head
    kernel = functools.partial(
        _attn_kernel, n_head=n_head, q_tile=q_tile,
        scale=1.0 / math.sqrt(dh), exp_bf16=exp_bf16)
    return pl.pallas_call(
        kernel,
        out_shape=jax.ShapeDtypeStruct((B, T, C), out_dtype),
        grid_spec=pltpu.PrefetchScalarGridSpec(
            num_scalar_prefetch=0,
            grid=(B, nq, nk),
            in_specs=[
                pl.BlockSpec((1, q_tile, C), lambda b, qi, ki: (b, qi, 0)),  # q tile
                # KV chunk; clamp to the diagonal so skipped (masked) blocks
                # don't trigger a new DMA.
                pl.BlockSpec((1, q_tile, 2 * C),
                             lambda b, qi, ki: (b, jnp.minimum(ki, qi), 0)),
                pl.BlockSpec((C, C), lambda b, qi, ki: (0, 0)),              # Wp bf16
                pl.BlockSpec((1, C), lambda b, qi, ki: (0, 0)),              # bp f32
            ],
            out_specs=pl.BlockSpec((1, q_tile, C), lambda b, qi, ki: (b, qi, 0)),
            scratch_shapes=[
                pltpu.VMEM((n_head, q_tile, 1), jnp.float32),    # running max
                pltpu.VMEM((n_head, q_tile, 1), jnp.float32),    # running sum
                pltpu.VMEM((n_head, q_tile, dh), jnp.float32),   # unnormalized PV
            ],
        ),
        compiler_params=pltpu.CompilerParams(
            dimension_semantics=("parallel", "parallel", "arbitrary"),
            vmem_limit_bytes=vmem_limit),
    )(q, kv, wp, bp)


# ---------------------------------------------------------------------------
# Public wrappers
# ---------------------------------------------------------------------------
def prepare_params(params):
    """One-time parameter preprocessing (hoisted out of the per-call path):
    fuse Wq|Wk|Wv into one (C, 3C) bf16 weight, cast Wp to bf16, biases f32.
    Weights are stored (in, out), i.e. pre-transposed from torch's (out, in)."""
    w_qkv = jnp.concatenate([params['wq'], params['wk'], params['wv']],
                            axis=1).astype(jnp.bfloat16)
    b_qkv = jnp.concatenate([params['bq'], params['bk'], params['bv']],
                            axis=1).astype(jnp.float32)
    return {'w_qkv': w_qkv, 'b_qkv': b_qkv,
            'wp': params['wp'].astype(jnp.bfloat16),
            'bp': params['bp'].astype(jnp.float32)}


@functools.partial(jax.jit, static_argnames=("n_head",))
def causal_cross_cond_self_attention(x, prepared, n_head):
    """x: (B, T, C) float32. prepared: output of prepare_params()."""
    B, T, C = x.shape
    vmem_limit, exp_bf16 = _tpu_config()
    row_tile = _row_tile(T, C, n_head, vmem_limit)
    q, kv = _qkv_projection(x, prepared['w_qkv'], prepared['b_qkv'],
                            row_tile, vmem_limit)
    return _attention(q, kv, prepared['wp'], prepared['bp'],
                      n_head=n_head, q_tile=row_tile, out_dtype=x.dtype,
                      vmem_limit=vmem_limit, exp_bf16=exp_bf16)


# ---------------------------------------------------------------------------
# Test harness
# ---------------------------------------------------------------------------
def _make_params(key, embed_dim):
    """Deterministic init mirroring nn.Linear shapes (weights stored (in, out))."""
    ks = jax.random.split(key, 8)
    lim = 1.0 / math.sqrt(embed_dim)

    def w(k):
        return jax.random.uniform(k, (embed_dim, embed_dim), jnp.float32, -lim, lim)

    def b(k):
        return jax.random.uniform(k, (1, embed_dim), jnp.float32, -lim, lim)

    return {'wq': w(ks[0]), 'bq': b(ks[1]),
            'wk': w(ks[2]), 'bk': b(ks[3]),
            'wv': w(ks[4]), 'bv': b(ks[5]),
            'wp': w(ks[6]), 'bp': b(ks[7])}


def _reference(x, params, n_head):
    """Pure-JAX f32 reference matching the PyTorch module (eval mode)."""
    B, T, C = x.shape
    Dh = C // n_head
    q = (x @ params['wq'] + params['bq']).reshape(B, T, n_head, Dh).transpose(0, 2, 1, 3)
    k = (x @ params['wk'] + params['bk']).reshape(B, T, n_head, Dh).transpose(0, 2, 1, 3)
    v = (x @ params['wv'] + params['bv']).reshape(B, T, n_head, Dh).transpose(0, 2, 1, 3)
    att = jnp.einsum('bhtd,bhsd->bhts', q, k) / math.sqrt(Dh)
    mask = jnp.tril(jnp.ones((T, T), dtype=bool))
    att = jnp.where(mask[None, None], att, -jnp.inf)
    att = jax.nn.softmax(att, axis=-1)
    y = jnp.einsum('bhts,bhsd->bhtd', att, v).transpose(0, 2, 1, 3).reshape(B, T, C)
    return y @ params['wp'] + params['bp']


if __name__ == "__main__":
    # Small shapes consistent with the module: embed_dim % 8 == 0, % n_head == 0.
    B, T, C, n_head = 2, 8, 32, 4

    key = jax.random.PRNGKey(0)
    kx, kp = jax.random.split(key)
    x = jax.random.normal(kx, (B, T, C), jnp.float32)
    params = _make_params(kp, C)
    prepared = prepare_params(params)

    out = causal_cross_cond_self_attention(x, prepared, n_head)
    out = jax.block_until_ready(out)

    ref = _reference(x, params, n_head)
    assert out.shape == (B, T, C)
    # Kernel runs MXU matmuls with bf16 operands (f32 accumulation), so compare
    # at bf16-level tolerance against the f32 reference.
    max_err = float(jnp.max(jnp.abs(out - ref)))
    assert jnp.allclose(out, ref, atol=5e-2, rtol=5e-2), \
        f"mismatch vs reference (max abs err = {max_err:.3e})"

    print("KERNEL_OK")
</pallas_src>

<mosaic_0001>
module attributes {stable_mosaic.version = 11 : i64} {
  func.func @_attn_kernel(%arg0: i32, %arg1: i32, %arg2: i32, %arg3: memref<1x8x32xbf16, #tpu.memory_space<vmem>>, %arg4: memref<1x8x64xbf16, #tpu.memory_space<vmem>>, %arg5: memref<32x32xbf16, #tpu.memory_space<vmem>>, %arg6: memref<1x32xf32, #tpu.memory_space<vmem>>, %arg7: memref<1x8x32xf32, #tpu.memory_space<vmem>>, %arg8: memref<4x8x1xf32, #tpu.memory_space<vmem>>, %arg9: memref<4x8x1xf32, #tpu.memory_space<vmem>>, %arg10: memref<4x8x8xf32, #tpu.memory_space<vmem>>) attributes {dimension_semantics = [#tpu.dimension_semantics<parallel>, #tpu.dimension_semantics<parallel>, #tpu.dimension_semantics<arbitrary>], iteration_bounds = array<i64: 2, 1, 1>, scalar_prefetch = 0 : i64, scratch_operands = 3 : i64, tpu.core_type = #tpu.core_type<tc>, window_params = [{transform_indices = @transform_0, window_bounds = array<i64: 1, 8, 32>}, {transform_indices = @transform_1, window_bounds = array<i64: 1, 8, 64>}, {pipeline_mode = #tpu.pipeline_mode<synchronous>, transform_indices = @transform_2, window_bounds = array<i64: 32, 32>}, {pipeline_mode = #tpu.pipeline_mode<synchronous>, transform_indices = @transform_3, window_bounds = array<i64: 1, 32>}, {transform_indices = @transform_4, window_bounds = array<i64: 1, 8, 32>}]} {
    %c0_i32 = arith.constant 0 : i32
    %0 = arith.cmpi eq, %arg2, %c0_i32 : i32
    %1 = arith.extui %0 : i1 to i32
    %c0_i32_0 = arith.constant 0 : i32
    %2 = arith.cmpi ne, %1, %c0_i32_0 : i32
    scf.if %2 {
      %cst = arith.constant -1.000000e+30 : f32
      %9 = vector.broadcast %cst : f32 to vector<4x8x1xf32>
      %c0 = arith.constant 0 : index
      %c0_4 = arith.constant 0 : index
      %c0_5 = arith.constant 0 : index
      %10 = vector.load %arg8[%c0, %c0_4, %c0_5] : memref<4x8x1xf32, #tpu.memory_space<vmem>>, vector<4x8x1xf32>
      tpu.vector_store %arg8[%c0, %c0_4, %c0_5], %9 {strides = array<i32>} : memref<4x8x1xf32, #tpu.memory_space<vmem>>, vector<4x8x1xf32>,
      %cst_6 = arith.constant 0.000000e+00 : f32
      %11 = vector.broadcast %cst_6 : f32 to vector<4x8x1xf32>
      %c0_7 = arith.constant 0 : index
      %c0_8 = arith.constant 0 : index
      %c0_9 = arith.constant 0 : index
      %12 = vector.load %arg9[%c0_7, %c0_8, %c0_9] : memref<4x8x1xf32, #tpu.memory_space<vmem>>, vector<4x8x1xf32>
      tpu.vector_store %arg9[%c0_7, %c0_8, %c0_9], %11 {strides = array<i32>} : memref<4x8x1xf32, #tpu.memory_space<vmem>>, vector<4x8x1xf32>,
      %cst_10 = arith.constant 0.000000e+00 : f32
      %13 = vector.broadcast %cst_10 : f32 to vector<4x8x8xf32>
      %c0_11 = arith.constant 0 : index
      %c0_12 = arith.constant 0 : index
      %c0_13 = arith.constant 0 : index
      %14 = vector.load %arg10[%c0_11, %c0_12, %c0_13] : memref<4x8x8xf32, #tpu.memory_space<vmem>>, vector<4x8x8xf32>
      tpu.vector_store %arg10[%c0_11, %c0_12, %c0_13], %13 {strides = array<i32>} : memref<4x8x8xf32, #tpu.memory_space<vmem>>, vector<4x8x8xf32>,
    } else {
    }
    %3 = arith.cmpi sle, %arg2, %arg1 : i32
    %4 = arith.extui %3 : i1 to i32
    %c0_i32_1 = arith.constant 0 : i32
    %5 = arith.cmpi ne, %4, %c0_i32_1 : i32
    scf.if %5 {
      %c0 = arith.constant 0 : index
      %c0_4 = arith.constant 0 : index
      %c0_5 = arith.constant 0 : index
      %9 = vector.load %arg3[%c0, %c0_4, %c0_5] : memref<1x8x32xbf16, #tpu.memory_space<vmem>>, vector<1x8x32xbf16>
      %10 = vector.shape_cast %9 : vector<1x8x32xbf16> to vector<8x32xbf16>
      %c0_6 = arith.constant 0 : index
      %c0_7 = arith.constant 0 : index
      %c0_8 = arith.constant 0 : index
      %11 = vector.load %arg4[%c0_6, %c0_7, %c0_8] : memref<1x8x64xbf16, #tpu.memory_space<vmem>>, vector<1x8x64xbf16>
      %12 = vector.shape_cast %11 : vector<1x8x64xbf16> to vector<8x64xbf16>
      %13 = vector.extract_strided_slice %12 {offsets = [0, 0], sizes = [8, 32], strides = [1, 1]} : vector<8x64xbf16> to vector<8x32xbf16>
      %14 = vector.extract_strided_slice %12 {offsets = [0, 32], sizes = [8, 32], strides = [1, 1]} : vector<8x64xbf16> to vector<8x32xbf16>
      %c8_i32 = arith.constant 8 : i32
      %15 = arith.muli %arg1, %c8_i32 : i32
      %16 = tpu.iota {dimensions = array<i32: 0>} : vector<8x8xi32>
      %17 = vector.broadcast %15 : i32 to vector<8x8xi32>
      %18 = arith.addi %17, %16 : vector<8x8xi32>
      %c8_i32_9 = arith.constant 8 : i32
      %19 = arith.muli %arg2, %c8_i32_9 : i32
      %20 = tpu.iota {dimensions = array<i32: 1>} : vector<8x8xi32>
      %21 = vector.broadcast %19 : i32 to vector<8x8xi32>
      %22 = arith.addi %21, %20 : vector<8x8xi32>
      %23 = arith.cmpi sle, %22, %18 : vector<8x8xi32>
      %cst = arith.constant 0.000000e+00 : f32
      %cst_10 = arith.constant -1.000000e+30 : f32
      %24 = vector.broadcast %cst : f32 to vector<8x8xf32>
      %25 = vector.broadcast %cst_10 : f32 to vector<8x8xf32>
      %26 = arith.select %23, %24, %25 : vector<8x8xi1>, vector<8x8xf32>
      %27 = vector.extract_strided_slice %10 {offsets = [0, 0], sizes = [8, 8], strides = [1, 1]} : vector<8x32xbf16> to vector<8x8xbf16>
      %28 = vector.extract_strided_slice %13 {offsets = [0, 0], sizes = [8, 8], strides = [1, 1]} : vector<8x32xbf16> to vector<8x8xbf16>
      %29 = vector.extract_strided_slice %14 {offsets = [0, 0], sizes = [8, 8], strides = [1, 1]} : vector<8x32xbf16> to vector<8x8xbf16>
      %cst_11 = arith.constant dense<0.000000e+00> : vector<8x8xf32>
      %30 = tpu.matmul %27, %28, %cst_11 {dimension_numbers = #tpu.dot_dimension_numbers<[1], [1], [0], [0], [0, 0, 1, 0], [], []>} : vector<8x8xbf16>, vector<8x8xbf16>, vector<8x8xf32> -> vector<8x8xf32>
      %cst_12 = arith.constant 0.353553385 : f32
      %31 = vector.broadcast %cst_12 : f32 to vector<8x8xf32>
      %32 = arith.mulf %30, %31 : vector<8x8xf32>
      %33 = arith.addf %32, %26 : vector<8x8xf32>
      %c0_13 = arith.constant 0 : index
      %c0_14 = arith.constant 0 : index
      %c0_15 = arith.constant 0 : index
      %34 = vector.load %arg8[%c0_13, %c0_14, %c0_15] : memref<4x8x1xf32, #tpu.memory_space<vmem>>, vector<1x8x1xf32>
      %35 = vector.shape_cast %34 : vector<1x8x1xf32> to vector<8x1xf32>
      %cst_16 = arith.constant dense<0xFF800000> : vector<8xf32>
      %36 = vector.multi_reduction <maximumf>, %33, %cst_16 [1] : vector<8x8xf32> to vector<8xf32>
      %37 = vector.shape_cast %36 : vector<8xf32> to vector<8x1xf32>
      %38 = arith.maximumf %35, %37 : vector<8x1xf32>
      %39 = arith.subf %35, %38 : vector<8x1xf32>
      %40 = math.exp %39 : vector<8x1xf32>
      %41 = vector.broadcast %38 : vector<8x1xf32> to vector<8x8xf32>
      %42 = arith.subf %33, %41 : vector<8x8xf32>
      %43 = math.exp %42 : vector<8x8xf32>
      %cst_17 = arith.constant dense<0.000000e+00> : vector<8xf32>
      %44 = vector.multi_reduction <add>, %43, %cst_17 [1] : vector<8x8xf32> to vector<8xf32>
      %45 = vector.shape_cast %44 : vector<8xf32> to vector<8x1xf32>
      %46 = arith.truncf %43 : vector<8x8xf32> to vector<8x8xbf16>
      %c0_18 = arith.constant 0 : index
      %c0_19 = arith.constant 0 : index
      %c0_20 = arith.constant 0 : index
      %47 = vector.load %arg9[%c0_18, %c0_19, %c0_20] : memref<4x8x1xf32, #tpu.memory_space<vmem>>, vector<1x8x1xf32>
      %48 = vector.shape_cast %47 : vector<1x8x1xf32> to vector<8x1xf32>
      %49 = arith.mulf %40, %48 : vector<8x1xf32>
      %50 = arith.addf %49, %45 : vector<8x1xf32>
      %c0_21 = arith.constant 0 : index
      %c0_22 = arith.constant 0 : index
      %c0_23 = arith.constant 0 : index
      %51 = vector.load %arg9[%c0_21, %c0_22, %c0_23] : memref<4x8x1xf32, #tpu.memory_space<vmem>>, vector<1x8x1xf32>
      %52 = vector.shape_cast %51 : vector<1x8x1xf32> to vector<8x1xf32>
      %53 = vector.shape_cast %50 : vector<8x1xf32> to vector<1x8x1xf32>
      tpu.vector_store %arg9[%c0_21, %c0_22, %c0_23], %53 {strides = array<i32>} : memref<4x8x1xf32, #tpu.memory_space<vmem>>, vector<1x8x1xf32>,
      %c0_24 = arith.constant 0 : index
      %c0_25 = arith.constant 0 : index
      %c0_26 = arith.constant 0 : index
      %54 = vector.load %arg10[%c0_24, %c0_25, %c0_26] : memref<4x8x8xf32, #tpu.memory_space<vmem>>, vector<1x8x8xf32>
      %55 = vector.shape_cast %54 : vector<1x8x8xf32> to vector<8x8xf32>
      %56 = vector.broadcast %40 : vector<8x1xf32> to vector<8x8xf32>
      %57 = arith.mulf %56, %55 : vector<8x8xf32>
      %cst_27 = arith.constant dense<0.000000e+00> : vector<8x8xf32>
      %58 = tpu.matmul %46, %29, %cst_27 {dimension_numbers = #tpu.dot_dimension_numbers<[1], [0], [0], [1], [0, 0, 1, 1], [], []>} : vector<8x8xbf16>, vector<8x8xbf16>, vector<8x8xf32> -> vector<8x8xf32>
      %59 = arith.addf %57, %58 : vector<8x8xf32>
      %c0_28 = arith.constant 0 : index
      %c0_29 = arith.constant 0 : index
      %c0_30 = arith.constant 0 : index
      %60 = vector.load %arg10[%c0_28, %c0_29, %c0_30] : memref<4x8x8xf32, #tpu.memory_space<vmem>>, vector<1x8x8xf32>
      %61 = vector.shape_cast %60 : vector<1x8x8xf32> to vector<8x8xf32>
      %62 = vector.shape_cast %59 : vector<8x8xf32> to vector<1x8x8xf32>
      tpu.vector_store %arg10[%c0_28, %c0_29, %c0_30], %62 {strides = array<i32>} : memref<4x8x8xf32, #tpu.memory_space<vmem>>, vector<1x8x8xf32>,
      %c0_31 = arith.constant 0 : index
      %c0_32 = arith.constant 0 : index
      %c0_33 = arith.constant 0 : index
      %63 = vector.load %arg8[%c0_31, %c0_32, %c0_33] : memref<4x8x1xf32, #tpu.memory_space<vmem>>, vector<1x8x1xf32>
      %64 = vector.shape_cast %63 : vector<1x8x1xf32> to vector<8x1xf32>
      %65 = vector.shape_cast %38 : vector<8x1xf32> to vector<1x8x1xf32>
      tpu.vector_store %arg8[%c0_31, %c0_32, %c0_33], %65 {strides = array<i32>} : memref<4x8x1xf32, #tpu.memory_space<vmem>>, vector<1x8x1xf32>,
      %66 = vector.extract_strided_slice %10 {offsets = [0, 8], sizes = [8, 8], strides = [1, 1]} : vector<8x32xbf16> to vector<8x8xbf16>
      %67 = vector.extract_strided_slice %13 {offsets = [0, 8], sizes = [8, 8], strides = [1, 1]} : vector<8x32xbf16> to vector<8x8xbf16>
      %68 = vector.extract_strided_slice %14 {offsets = [0, 8], sizes = [8, 8], strides = [1, 1]} : vector<8x32xbf16> to vector<8x8xbf16>
      %cst_34 = arith.constant dense<0.000000e+00> : vector<8x8xf32>
      %69 = tpu.matmul %66, %67, %cst_34 {dimension_numbers = #tpu.dot_dimension_numbers<[1], [1], [0], [0], [0, 0, 1, 0], [], []>} : vector<8x8xbf16>, vector<8x8xbf16>, vector<8x8xf32> -> vector<8x8xf32>
      %cst_35 = arith.constant 0.353553385 : f32
      %70 = vector.broadcast %cst_35 : f32 to vector<8x8xf32>
      %71 = arith.mulf %69, %70 : vector<8x8xf32>
      %72 = arith.addf %71, %26 : vector<8x8xf32>
      %c1 = arith.constant 1 : index
      %c0_36 = arith.constant 0 : index
      %c0_37 = arith.constant 0 : index
      %73 = vector.load %arg8[%c1, %c0_36, %c0_37] : memref<4x8x1xf32, #tpu.memory_space<vmem>>, vector<1x8x1xf32>
      %74 = vector.shape_cast %73 : vector<1x8x1xf32> to vector<8x1xf32>
      %cst_38 = arith.constant dense<0xFF800000> : vector<8xf32>
      %75 = vector.multi_reduction <maximumf>, %72, %cst_38 [1] : vector<8x8xf32> to vector<8xf32>
      %76 = vector.shape_cast %75 : vector<8xf32> to vector<8x1xf32>
      %77 = arith.maximumf %74, %76 : vector<8x1xf32>
      %78 = arith.subf %74, %77 : vector<8x1xf32>
      %79 = math.exp %78 : vector<8x1xf32>
      %80 = vector.broadcast %77 : vector<8x1xf32> to vector<8x8xf32>
      %81 = arith.subf %72, %80 : vector<8x8xf32>
      %82 = math.exp %81 : vector<8x8xf32>
      %cst_39 = arith.constant dense<0.000000e+00> : vector<8xf32>
      %83 = vector.multi_reduction <add>, %82, %cst_39 [1] : vector<8x8xf32> to vector<8xf32>
      %84 = vector.shape_cast %83 : vector<8xf32> to vector<8x1xf32>
      %85 = arith.truncf %82 : vector<8x8xf32> to vector<8x8xbf16>
      %c1_40 = arith.constant 1 : index
      %c0_41 = arith.constant 0 : index
      %c0_42 = arith.constant 0 : index
      %86 = vector.load %arg9[%c1_40, %c0_41, %c0_42] : memref<4x8x1xf32, #tpu.memory_space<vmem>>, vector<1x8x1xf32>
      %87 = vector.shape_cast %86 : vector<1x8x1xf32> to vector<8x1xf32>
      %88 = arith.mulf %79, %87 : vector<8x1xf32>
      %89 = arith.addf %88, %84 : vector<8x1xf32>
      %c1_43 = arith.constant 1 : index
      %c0_44 = arith.constant 0 : index
      %c0_45 = arith.constant 0 : index
      %90 = vector.load %arg9[%c1_43, %c0_44, %c0_45] : memref<4x8x1xf32, #tpu.memory_space<vmem>>, vector<1x8x1xf32>
      %91 = vector.shape_cast %90 : vector<1x8x1xf32> to vector<8x1xf32>
      %92 = vector.shape_cast %89 : vector<8x1xf32> to vector<1x8x1xf32>
      tpu.vector_store %arg9[%c1_43, %c0_44, %c0_45], %92 {strides = array<i32>} : memref<4x8x1xf32, #tpu.memory_space<vmem>>, vector<1x8x1xf32>,
      %c1_46 = arith.constant 1 : index
      %c0_47 = arith.constant 0 : index
      %c0_48 = arith.constant 0 : index
      %93 = vector.load %arg10[%c1_46, %c0_47, %c0_48] : memref<4x8x8xf32, #tpu.memory_space<vmem>>, vector<1x8x8xf32>
      %94 = vector.shape_cast %93 : vector<1x8x8xf32> to vector<8x8xf32>
      %95 = vector.broadcast %79 : vector<8x1xf32> to vector<8x8xf32>
      %96 = arith.mulf %95, %94 : vector<8x8xf32>
      %cst_49 = arith.constant dense<0.000000e+00> : vector<8x8xf32>
      %97 = tpu.matmul %85, %68, %cst_49 {dimension_numbers = #tpu.dot_dimension_numbers<[1], [0], [0], [1], [0, 0, 1, 1], [], []>} : vector<8x8xbf16>, vector<8x8xbf16>, vector<8x8xf32> -> vector<8x8xf32>
      %98 = arith.addf %96, %97 : vector<8x8xf32>
      %c1_50 = arith.constant 1 : index
      %c0_51 = arith.constant 0 : index
      %c0_52 = arith.constant 0 : index
      %99 = vector.load %arg10[%c1_50, %c0_51, %c0_52] : memref<4x8x8xf32, #tpu.memory_space<vmem>>, vector<1x8x8xf32>
      %100 = vector.shape_cast %99 : vector<1x8x8xf32> to vector<8x8xf32>
      %101 = vector.shape_cast %98 : vector<8x8xf32> to vector<1x8x8xf32>
      tpu.vector_store %arg10[%c1_50, %c0_51, %c0_52], %101 {strides = array<i32>} : memref<4x8x8xf32, #tpu.memory_space<vmem>>, vector<1x8x8xf32>,
      %c1_53 = arith.constant 1 : index
      %c0_54 = arith.constant 0 : index
      %c0_55 = arith.constant 0 : index
      %102 = vector.load %arg8[%c1_53, %c0_54, %c0_55] : memref<4x8x1xf32, #tpu.memory_space<vmem>>, vector<1x8x1xf32>
      %103 = vector.shape_cast %102 : vector<1x8x1xf32> to vector<8x1xf32>
      %104 = vector.shape_cast %77 : vector<8x1xf32> to vector<1x8x1xf32>
      tpu.vector_store %arg8[%c1_53, %c0_54, %c0_55], %104 {strides = array<i32>} : memref<4x8x1xf32, #tpu.memory_space<vmem>>, vector<1x8x1xf32>,
      %105 = vector.extract_strided_slice %10 {offsets = [0, 16], sizes = [8, 8], strides = [1, 1]} : vector<8x32xbf16> to vector<8x8xbf16>
      %106 = vector.extract_strided_slice %13 {offsets = [0, 16], sizes = [8, 8], strides = [1, 1]} : vector<8x32xbf16> to vector<8x8xbf16>
      %107 = vector.extract_strided_slice %14 {offsets = [0, 16], sizes = [8, 8], strides = [1, 1]} : vector<8x32xbf16> to vector<8x8xbf16>
      %cst_56 = arith.constant dense<0.000000e+00> : vector<8x8xf32>
      %108 = tpu.matmul %105, %106, %cst_56 {dimension_numbers = #tpu.dot_dimension_numbers<[1], [1], [0], [0], [0, 0, 1, 0], [], []>} : vector<8x8xbf16>, vector<8x8xbf16>, vector<8x8xf32> -> vector<8x8xf32>
      %cst_57 = arith.constant 0.353553385 : f32
      %109 = vector.broadcast %cst_57 : f32 to vector<8x8xf32>
      %110 = arith.mulf %108, %109 : vector<8x8xf32>
      %111 = arith.addf %110, %26 : vector<8x8xf32>
      %c2 = arith.constant 2 : index
      %c0_58 = arith.constant 0 : index
      %c0_59 = arith.constant 0 : index
      %112 = vector.load %arg8[%c2, %c0_58, %c0_59] : memref<4x8x1xf32, #tpu.memory_space<vmem>>, vector<1x8x1xf32>
      %113 = vector.shape_cast %112 : vector<1x8x1xf32> to vector<8x1xf32>
      %cst_60 = arith.constant dense<0xFF800000> : vector<8xf32>
      %114 = vector.multi_reduction <maximumf>, %111, %cst_60 [1] : vector<8x8xf32> to vector<8xf32>
      %115 = vector.shape_cast %114 : vector<8xf32> to vector<8x1xf32>
      %116 = arith.maximumf %113, %115 : vector<8x1xf32>
      %117 = arith.subf %113, %116 : vector<8x1xf32>
      %118 = math.exp %117 : vector<8x1xf32>
      %119 = vector.broadcast %116 : vector<8x1xf32> to vector<8x8xf32>
      %120 = arith.subf %111, %119 : vector<8x8xf32>
      %121 = math.exp %120 : vector<8x8xf32>
      %cst_61 = arith.constant dense<0.000000e+00> : vector<8xf32>
      %122 = vector.multi_reduction <add>, %121, %cst_61 [1] : vector<8x8xf32> to vector<8xf32>
      %123 = vector.shape_cast %122 : vector<8xf32> to vector<8x1xf32>
      %124 = arith.truncf %121 : vector<8x8xf32> to vector<8x8xbf16>
      %c2_62 = arith.constant 2 : index
      %c0_63 = arith.constant 0 : index
      %c0_64 = arith.constant 0 : index
      %125 = vector.load %arg9[%c2_62, %c0_63, %c0_64] : memref<4x8x1xf32, #tpu.memory_space<vmem>>, vector<1x8x1xf32>
      %126 = vector.shape_cast %125 : vector<1x8x1xf32> to vector<8x1xf32>
      %127 = arith.mulf %118, %126 : vector<8x1xf32>
      %128 = arith.addf %127, %123 : vector<8x1xf32>
      %c2_65 = arith.constant 2 : index
      %c0_66 = arith.constant 0 : index
      %c0_67 = arith.constant 0 : index
      %129 = vector.load %arg9[%c2_65, %c0_66, %c0_67] : memref<4x8x1xf32, #tpu.memory_space<vmem>>, vector<1x8x1xf32>
      %130 = vector.shape_cast %129 : vector<1x8x1xf32> to vector<8x1xf32>
      %131 = vector.shape_cast %128 : vector<8x1xf32> to vector<1x8x1xf32>
      tpu.vector_store %arg9[%c2_65, %c0_66, %c0_67], %131 {strides = array<i32>} : memref<4x8x1xf32, #tpu.memory_space<vmem>>, vector<1x8x1xf32>,
      %c2_68 = arith.constant 2 : index
      %c0_69 = arith.constant 0 : index
      %c0_70 = arith.constant 0 : index
      %132 = vector.load %arg10[%c2_68, %c0_69, %c0_70] : memref<4x8x8xf32, #tpu.memory_space<vmem>>, vector<1x8x8xf32>
      %133 = vector.shape_cast %132 : vector<1x8x8xf32> to vector<8x8xf32>
      %134 = vector.broadcast %118 : vector<8x1xf32> to vector<8x8xf32>
      %135 = arith.mulf %134, %133 : vector<8x8xf32>
      %cst_71 = arith.constant dense<0.000000e+00> : vector<8x8xf32>
      %136 = tpu.matmul %124, %107, %cst_71 {dimension_numbers = #tpu.dot_dimension_numbers<[1], [0], [0], [1], [0, 0, 1, 1], [], []>} : vector<8x8xbf16>, vector<8x8xbf16>, vector<8x8xf32> -> vector<8x8xf32>
      %137 = arith.addf %135, %136 : vector<8x8xf32>
      %c2_72 = arith.constant 2 : index
      %c0_73 = arith.constant 0 : index
      %c0_74 = arith.constant 0 : index
      %138 = vector.load %arg10[%c2_72, %c0_73, %c0_74] : memref<4x8x8xf32, #tpu.memory_space<vmem>>, vector<1x8x8xf32>
      %139 = vector.shape_cast %138 : vector<1x8x8xf32> to vector<8x8xf32>
      %140 = vector.shape_cast %137 : vector<8x8xf32> to vector<1x8x8xf32>
      tpu.vector_store %arg10[%c2_72, %c0_73, %c0_74], %140 {strides = array<i32>} : memref<4x8x8xf32, #tpu.memory_space<vmem>>, vector<1x8x8xf32>,
      %c2_75 = arith.constant 2 : index
      %c0_76 = arith.constant 0 : index
      %c0_77 = arith.constant 0 : index
      %141 = vector.load %arg8[%c2_75, %c0_76, %c0_77] : memref<4x8x1xf32, #tpu.memory_space<vmem>>, vector<1x8x1xf32>
      %142 = vector.shape_cast %141 : vector<1x8x1xf32> to vector<8x1xf32>
      %143 = vector.shape_cast %116 : vector<8x1xf32> to vector<1x8x1xf32>
      tpu.vector_store %arg8[%c2_75, %c0_76, %c0_77], %143 {strides = array<i32>} : memref<4x8x1xf32, #tpu.memory_space<vmem>>, vector<1x8x1xf32>,
      %144 = vector.extract_strided_slice %10 {offsets = [0, 24], sizes = [8, 8], strides = [1, 1]} : vector<8x32xbf16> to vector<8x8xbf16>
      %145 = vector.extract_strided_slice %13 {offsets = [0, 24], sizes = [8, 8], strides = [1, 1]} : vector<8x32xbf16> to vector<8x8xbf16>
      %146 = vector.extract_strided_slice %14 {offsets = [0, 24], sizes = [8, 8], strides = [1, 1]} : vector<8x32xbf16> to vector<8x8xbf16>
      %cst_78 = arith.constant dense<0.000000e+00> : vector<8x8xf32>
      %147 = tpu.matmul %144, %145, %cst_78 {dimension_numbers = #tpu.dot_dimension_numbers<[1], [1], [0], [0], [0, 0, 1, 0], [], []>} : vector<8x8xbf16>, vector<8x8xbf16>, vector<8x8xf32> -> vector<8x8xf32>
      %cst_79 = arith.constant 0.353553385 : f32
      %148 = vector.broadcast %cst_79 : f32 to vector<8x8xf32>
      %149 = arith.mulf %147, %148 : vector<8x8xf32>
      %150 = arith.addf %149, %26 : vector<8x8xf32>
      %c3 = arith.constant 3 : index
      %c0_80 = arith.constant 0 : index
      %c0_81 = arith.constant 0 : index
      %151 = vector.load %arg8[%c3, %c0_80, %c0_81] : memref<4x8x1xf32, #tpu.memory_space<vmem>>, vector<1x8x1xf32>
      %152 = vector.shape_cast %151 : vector<1x8x1xf32> to vector<8x1xf32>
      %cst_82 = arith.constant dense<0xFF800000> : vector<8xf32>
      %153 = vector.multi_reduction <maximumf>, %150, %cst_82 [1] : vector<8x8xf32> to vector<8xf32>
      %154 = vector.shape_cast %153 : vector<8xf32> to vector<8x1xf32>
      %155 = arith.maximumf %152, %154 : vector<8x1xf32>
      %156 = arith.subf %152, %155 : vector<8x1xf32>
      %157 = math.exp %156 : vector<8x1xf32>
      %158 = vector.broadcast %155 : vector<8x1xf32> to vector<8x8xf32>
      %159 = arith.subf %150, %158 : vector<8x8xf32>
      %160 = math.exp %159 : vector<8x8xf32>
      %cst_83 = arith.constant dense<0.000000e+00> : vector<8xf32>
      %161 = vector.multi_reduction <add>, %160, %cst_83 [1] : vector<8x8xf32> to vector<8xf32>
      %162 = vector.shape_cast %161 : vector<8xf32> to vector<8x1xf32>
      %163 = arith.truncf %160 : vector<8x8xf32> to vector<8x8xbf16>
      %c3_84 = arith.constant 3 : index
      %c0_85 = arith.constant 0 : index
      %c0_86 = arith.constant 0 : index
      %164 = vector.load %arg9[%c3_84, %c0_85, %c0_86] : memref<4x8x1xf32, #tpu.memory_space<vmem>>, vector<1x8x1xf32>
      %165 = vector.shape_cast %164 : vector<1x8x1xf32> to vector<8x1xf32>
      %166 = arith.mulf %157, %165 : vector<8x1xf32>
      %167 = arith.addf %166, %162 : vector<8x1xf32>
      %c3_87 = arith.constant 3 : index
      %c0_88 = arith.constant 0 : index
      %c0_89 = arith.constant 0 : index
      %168 = vector.load %arg9[%c3_87, %c0_88, %c0_89] : memref<4x8x1xf32, #tpu.memory_space<vmem>>, vector<1x8x1xf32>
      %169 = vector.shape_cast %168 : vector<1x8x1xf32> to vector<8x1xf32>
      %170 = vector.shape_cast %167 : vector<8x1xf32> to vector<1x8x1xf32>
      tpu.vector_store %arg9[%c3_87, %c0_88, %c0_89], %170 {strides = array<i32>} : memref<4x8x1xf32, #tpu.memory_space<vmem>>, vector<1x8x1xf32>,
      %c3_90 = arith.constant 3 : index
      %c0_91 = arith.constant 0 : index
      %c0_92 = arith.constant 0 : index
      %171 = vector.load %arg10[%c3_90, %c0_91, %c0_92] : memref<4x8x8xf32, #tpu.memory_space<vmem>>, vector<1x8x8xf32>
      %172 = vector.shape_cast %171 : vector<1x8x8xf32> to vector<8x8xf32>
      %173 = vector.broadcast %157 : vector<8x1xf32> to vector<8x8xf32>
      %174 = arith.mulf %173, %172 : vector<8x8xf32>
      %cst_93 = arith.constant dense<0.000000e+00> : vector<8x8xf32>
      %175 = tpu.matmul %163, %146, %cst_93 {dimension_numbers = #tpu.dot_dimension_numbers<[1], [0], [0], [1], [0, 0, 1, 1], [], []>} : vector<8x8xbf16>, vector<8x8xbf16>, vector<8x8xf32> -> vector<8x8xf32>
      %176 = arith.addf %174, %175 : vector<8x8xf32>
      %c3_94 = arith.constant 3 : index
      %c0_95 = arith.constant 0 : index
      %c0_96 = arith.constant 0 : index
      %177 = vector.load %arg10[%c3_94, %c0_95, %c0_96] : memref<4x8x8xf32, #tpu.memory_space<vmem>>, vector<1x8x8xf32>
      %178 = vector.shape_cast %177 : vector<1x8x8xf32> to vector<8x8xf32>
      %179 = vector.shape_cast %176 : vector<8x8xf32> to vector<1x8x8xf32>
      tpu.vector_store %arg10[%c3_94, %c0_95, %c0_96], %179 {strides = array<i32>} : memref<4x8x8xf32, #tpu.memory_space<vmem>>, vector<1x8x8xf32>,
      %c3_97 = arith.constant 3 : index
      %c0_98 = arith.constant 0 : index
      %c0_99 = arith.constant 0 : index
      %180 = vector.load %arg8[%c3_97, %c0_98, %c0_99] : memref<4x8x1xf32, #tpu.memory_space<vmem>>, vector<1x8x1xf32>
      %181 = vector.shape_cast %180 : vector<1x8x1xf32> to vector<8x1xf32>
      %182 = vector.shape_cast %155 : vector<8x1xf32> to vector<1x8x1xf32>
      tpu.vector_store %arg8[%c3_97, %c0_98, %c0_99], %182 {strides = array<i32>} : memref<4x8x1xf32, #tpu.memory_space<vmem>>, vector<1x8x1xf32>,
    } else {
    }
    %c0_i32_2 = arith.constant 0 : i32
    %6 = arith.cmpi eq, %arg2, %c0_i32_2 : i32
    %7 = arith.extui %6 : i1 to i32
    %c0_i32_3 = arith.constant 0 : i32
    %8 = arith.cmpi ne, %7, %c0_i32_3 : i32
    scf.if %8 {
      %c0 = arith.constant 0 : index
      %c0_4 = arith.constant 0 : index
      %c0_5 = arith.constant 0 : index
      %9 = vector.load %arg9[%c0, %c0_4, %c0_5] : memref<4x8x1xf32, #tpu.memory_space<vmem>>, vector<1x8x1xf32>
      %10 = vector.shape_cast %9 : vector<1x8x1xf32> to vector<8x1xf32>
      %11 = tpu.reciprocal %10 : vector<8x1xf32> -> vector<8x1xf32>
      %c0_6 = arith.constant 0 : index
      %c0_7 = arith.constant 0 : index
      %c0_8 = arith.constant 0 : index
      %12 = vector.load %arg10[%c0_6, %c0_7, %c0_8] : memref<4x8x8xf32, #tpu.memory_space<vmem>>, vector<1x8x8xf32>
      %13 = vector.shape_cast %12 : vector<1x8x8xf32> to vector<8x8xf32>
      %14 = vector.broadcast %11 : vector<8x1xf32> to vector<8x8xf32>
      %15 = arith.mulf %13, %14 : vector<8x8xf32>
      %16 = arith.truncf %15 : vector<8x8xf32> to vector<8x8xbf16>
      %c1 = arith.constant 1 : index
      %c0_9 = arith.constant 0 : index
      %c0_10 = arith.constant 0 : index
      %17 = vector.load %arg9[%c1, %c0_9, %c0_10] : memref<4x8x1xf32, #tpu.memory_space<vmem>>, vector<1x8x1xf32>
      %18 = vector.shape_cast %17 : vector<1x8x1xf32> to vector<8x1xf32>
      %19 = tpu.reciprocal %18 : vector<8x1xf32> -> vector<8x1xf32>
      %c1_11 = arith.constant 1 : index
      %c0_12 = arith.constant 0 : index
      %c0_13 = arith.constant 0 : index
      %20 = vector.load %arg10[%c1_11, %c0_12, %c0_13] : memref<4x8x8xf32, #tpu.memory_space<vmem>>, vector<1x8x8xf32>
      %21 = vector.shape_cast %20 : vector<1x8x8xf32> to vector<8x8xf32>
      %22 = vector.broadcast %19 : vector<8x1xf32> to vector<8x8xf32>
      %23 = arith.mulf %21, %22 : vector<8x8xf32>
      %24 = arith.truncf %23 : vector<8x8xf32> to vector<8x8xbf16>
      %c2 = arith.constant 2 : index
      %c0_14 = arith.constant 0 : index
      %c0_15 = arith.constant 0 : index
      %25 = vector.load %arg9[%c2, %c0_14, %c0_15] : memref<4x8x1xf32, #tpu.memory_space<vmem>>, vector<1x8x1xf32>
      %26 = vector.shape_cast %25 : vector<1x8x1xf32> to vector<8x1xf32>
      %27 = tpu.reciprocal %26 : vector<8x1xf32> -> vector<8x1xf32>
      %c2_16 = arith.constant 2 : index
      %c0_17 = arith.constant 0 : index
      %c0_18 = arith.constant 0 : index
      %28 = vector.load %arg10[%c2_16, %c0_17, %c0_18] : memref<4x8x8xf32, #tpu.memory_space<vmem>>, vector<1x8x8xf32>
      %29 = vector.shape_cast %28 : vector<1x8x8xf32> to vector<8x8xf32>
      %30 = vector.broadcast %27 : vector<8x1xf32> to vector<8x8xf32>
      %31 = arith.mulf %29, %30 : vector<8x8xf32>
      %32 = arith.truncf %31 : vector<8x8xf32> to vector<8x8xbf16>
      %c3 = arith.constant 3 : index
      %c0_19 = arith.constant 0 : index
      %c0_20 = arith.constant 0 : index
      %33 = vector.load %arg9[%c3, %c0_19, %c0_20] : memref<4x8x1xf32, #tpu.memory_space<vmem>>, vector<1x8x1xf32>
      %34 = vector.shape_cast %33 : vector<1x8x1xf32> to vector<8x1xf32>
      %35 = tpu.reciprocal %34 : vector<8x1xf32> -> vector<8x1xf32>
      %c3_21 = arith.constant 3 : index
      %c0_22 = arith.constant 0 : index
      %c0_23 = arith.constant 0 : index
      %36 = vector.load %arg10[%c3_21, %c0_22, %c0_23] : memref<4x8x8xf32, #tpu.memory_space<vmem>>, vector<1x8x8xf32>
      %37 = vector.shape_cast %36 : vector<1x8x8xf32> to vector<8x8xf32>
      %38 = vector.broadcast %35 : vector<8x1xf32> to vector<8x8xf32>
      %39 = arith.mulf %37, %38 : vector<8x8xf32>
      %40 = arith.truncf %39 : vector<8x8xf32> to vector<8x8xbf16>
      %41 = tpu.concatenate %16, %24, %32, %40 in 1 : vector<8x8xbf16>, vector<8x8xbf16>, vector<8x8xbf16>, vector<8x8xbf16> -> vector<8x32xbf16>
      %c0_24 = arith.constant 0 : index
      %c0_25 = arith.constant 0 : index
      %42 = vector.load %arg5[%c0_24, %c0_25] : memref<32x32xbf16, #tpu.memory_space<vmem>>, vector<32x32xbf16>
      %cst = arith.constant dense<0.000000e+00> : vector<8x32xf32>
      %43 = tpu.matmul %41, %42, %cst {dimension_numbers = #tpu.dot_dimension_numbers<[1], [0], [0], [1], [0, 0, 1, 1], [], []>} : vector<8x32xbf16>, vector<32x32xbf16>, vector<8x32xf32> -> vector<8x32xf32>
      %c0_26 = arith.constant 0 : index
      %c0_27 = arith.constant 0 : index
      %44 = vector.load %arg6[%c0_26, %c0_27] : memref<1x32xf32, #tpu.memory_space<vmem>>, vector<1x32xf32>
      %45 = vector.broadcast %44 : vector<1x32xf32> to vector<8x32xf32>
      %46 = arith.addf %43, %45 : vector<8x32xf32>
      %c0_28 = arith.constant 0 : index
      %c0_29 = arith.constant 0 : index
      %c0_30 = arith.constant 0 : index
      %47 = vector.load %arg7[%c0_28, %c0_29, %c0_30] : memref<1x8x32xf32, #tpu.memory_space<vmem>>, vector<1x8x32xf32>
      %48 = vector.shape_cast %47 : vector<1x8x32xf32> to vector<8x32xf32>
      %49 = vector.shape_cast %46 : vector<8x32xf32> to vector<1x8x32xf32>
      tpu.vector_store %arg7[%c0_28, %c0_29, %c0_30], %49 {strides = array<i32>} : memref<1x8x32xf32, #tpu.memory_space<vmem>>, vector<1x8x32xf32>,
    } else {
    }
    return
  }
  func.func @transform_0(%arg0: i32, %arg1: i32, %arg2: i32) -> (i32, i32, i32) {
    %c0_i32 = arith.constant 0 : i32
    %c0_i32_0 = arith.constant 0 : i32
    return %arg0, %arg1, %c0_i32 : i32, i32, i32
  }
  func.func @transform_1(%arg0: i32, %arg1: i32, %arg2: i32) -> (i32, i32, i32) {
    %0 = arith.minsi %arg2, %arg1 : i32
    %c0_i32 = arith.constant 0 : i32
    %c0_i32_0 = arith.constant 0 : i32
    return %arg0, %0, %c0_i32 : i32, i32, i32
  }
  func.func @transform_2(%arg0: i32, %arg1: i32, %arg2: i32) -> (i32, i32) {
    %c0_i32 = arith.constant 0 : i32
    %c0_i32_0 = arith.constant 0 : i32
    %c0_i32_1 = arith.constant 0 : i32
    return %c0_i32, %c0_i32_0 : i32, i32
  }
  func.func @transform_3(%arg0: i32, %arg1: i32, %arg2: i32) -> (i32, i32) {
    %c0_i32 = arith.constant 0 : i32
    %c0_i32_0 = arith.constant 0 : i32
    %c0_i32_1 = arith.constant 0 : i32
    return %c0_i32, %c0_i32_0 : i32, i32
  }
  func.func @transform_4(%arg0: i32, %arg1: i32, %arg2: i32) -> (i32, i32, i32) {
    %c0_i32 = arith.constant 0 : i32
    %c0_i32_0 = arith.constant 0 : i32
    return %arg0, %arg1, %c0_i32 : i32, i32, i32
  }
}

module attributes {stable_mosaic.version = 11 : i64} {
  func.func @_qkv_proj_kernel(%arg0: i32, %arg1: i32, %arg2: memref<1x8x32xf32, #tpu.memory_space<vmem>>, %arg3: memref<32x96xbf16, #tpu.memory_space<vmem>>, %arg4: memref<1x96xf32, #tpu.memory_space<vmem>>, %arg5: memref<1x8x32xbf16, #tpu.memory_space<vmem>>, %arg6: memref<1x8x64xbf16, #tpu.memory_space<vmem>>) attributes {dimension_semantics = [#tpu.dimension_semantics<parallel>, #tpu.dimension_semantics<parallel>], iteration_bounds = array<i64: 2, 1>, scalar_prefetch = 0 : i64, scratch_operands = 0 : i64, tpu.core_type = #tpu.core_type<tc>, window_params = [{transform_indices = @transform_0, window_bounds = array<i64: 1, 8, 32>}, {pipeline_mode = #tpu.pipeline_mode<synchronous>, transform_indices = @transform_1, window_bounds = array<i64: 32, 96>}, {pipeline_mode = #tpu.pipeline_mode<synchronous>, transform_indices = @transform_2, window_bounds = array<i64: 1, 96>}, {transform_indices = @transform_3, window_bounds = array<i64: 1, 8, 32>}, {transform_indices = @transform_4, window_bounds = array<i64: 1, 8, 64>}]} {
    %c0 = arith.constant 0 : index
    %c0_0 = arith.constant 0 : index
    %c0_1 = arith.constant 0 : index
    %0 = vector.load %arg2[%c0, %c0_0, %c0_1] : memref<1x8x32xf32, #tpu.memory_space<vmem>>, vector<1x8x32xf32>
    %1 = vector.shape_cast %0 : vector<1x8x32xf32> to vector<8x32xf32>
    %2 = arith.truncf %1 : vector<8x32xf32> to vector<8x32xbf16>
    %c0_2 = arith.constant 0 : index
    %c0_3 = arith.constant 0 : index
    %3 = vector.load %arg3[%c0_2, %c0_3] : memref<32x96xbf16, #tpu.memory_space<vmem>>, vector<32x96xbf16>
    %cst = arith.constant dense<0.000000e+00> : vector<8x96xf32>
    %4 = tpu.matmul %2, %3, %cst {dimension_numbers = #tpu.dot_dimension_numbers<[1], [0], [0], [1], [0, 0, 1, 1], [], []>} : vector<8x32xbf16>, vector<32x96xbf16>, vector<8x96xf32> -> vector<8x96xf32>
    %c0_4 = arith.constant 0 : index
    %c0_5 = arith.constant 0 : index
    %5 = vector.load %arg4[%c0_4, %c0_5] : memref<1x96xf32, #tpu.memory_space<vmem>>, vector<1x96xf32>
    %6 = vector.broadcast %5 : vector<1x96xf32> to vector<8x96xf32>
    %7 = arith.addf %4, %6 : vector<8x96xf32>
    %8 = vector.extract_strided_slice %7 {offsets = [0, 0], sizes = [8, 32], strides = [1, 1]} : vector<8x96xf32> to vector<8x32xf32>
    %9 = arith.truncf %8 : vector<8x32xf32> to vector<8x32xbf16>
    %c0_6 = arith.constant 0 : index
    %c0_7 = arith.constant 0 : index
    %c0_8 = arith.constant 0 : index
    %10 = vector.load %arg5[%c0_6, %c0_7, %c0_8] : memref<1x8x32xbf16, #tpu.memory_space<vmem>>, vector<1x8x32xbf16>
    %11 = vector.shape_cast %10 : vector<1x8x32xbf16> to vector<8x32xbf16>
    %12 = vector.shape_cast %9 : vector<8x32xbf16> to vector<1x8x32xbf16>
    tpu.vector_store %arg5[%c0_6, %c0_7, %c0_8], %12 {strides = array<i32>} : memref<1x8x32xbf16, #tpu.memory_space<vmem>>, vector<1x8x32xbf16>,
    %13 = vector.extract_strided_slice %7 {offsets = [0, 32], sizes = [8, 64], strides = [1, 1]} : vector<8x96xf32> to vector<8x64xf32>
    %14 = arith.truncf %13 : vector<8x64xf32> to vector<8x64xbf16>
    %c0_9 = arith.constant 0 : index
    %c0_10 = arith.constant 0 : index
    %c0_11 = arith.constant 0 : index
    %15 = vector.load %arg6[%c0_9, %c0_10, %c0_11] : memref<1x8x64xbf16, #tpu.memory_space<vmem>>, vector<1x8x64xbf16>
    %16 = vector.shape_cast %15 : vector<1x8x64xbf16> to vector<8x64xbf16>
    %17 = vector.shape_cast %14 : vector<8x64xbf16> to vector<1x8x64xbf16>
    tpu.vector_store %arg6[%c0_9, %c0_10, %c0_11], %17 {strides = array<i32>} : memref<1x8x64xbf16, #tpu.memory_space<vmem>>, vector<1x8x64xbf16>,
    return
  }
  func.func @transform_0(%arg0: i32, %arg1: i32) -> (i32, i32, i32) {
    %c0_i32 = arith.constant 0 : i32
    %c0_i32_0 = arith.constant 0 : i32
    return %arg0, %arg1, %c0_i32 : i32, i32, i32
  }
  func.func @transform_1(%arg0: i32, %arg1: i32) -> (i32, i32) {
    %c0_i32 = arith.constant 0 : i32
    %c0_i32_0 = arith.constant 0 : i32
    %c0_i32_1 = arith.constant 0 : i32
    return %c0_i32, %c0_i32_0 : i32, i32
  }
  func.func @transform_2(%arg0: i32, %arg1: i32) -> (i32, i32) {
    %c0_i32 = arith.constant 0 : i32
    %c0_i32_0 = arith.constant 0 : i32
    %c0_i32_1 = arith.constant 0 : i32
    return %c0_i32, %c0_i32_0 : i32, i32
  }
  func.func @transform_3(%arg0: i32, %arg1: i32) -> (i32, i32, i32) {
    %c0_i32 = arith.constant 0 : i32
    %c0_i32_0 = arith.constant 0 : i32
    return %arg0, %arg1, %c0_i32 : i32, i32, i32
  }
  func.func @transform_4(%arg0: i32, %arg1: i32) -> (i32, i32, i32) {
    %c0_i32 = arith.constant 0 : i32
    %c0_i32_0 = arith.constant 0 : i32
    return %arg0, %arg1, %c0_i32 : i32, i32, i32
  }
}

</mosaic_0001>

<llo_original>
// kernel: causal_cross_cond_self_attention.2
$region0: #{causal_cross_cond_self_attention.2}
  #allocation0 [shape = 'u32[]', space=smem, size = 0x4, offset = 0x4, fixed_abs, tag = 'smem constant byte address 0x4 - core index']
  #allocation1 [shape = 'u32[72,128]{1,0:T(1,128)}', space=vmem, size = 0x9000, scoped, tag = 'internal scratch']
  %s0 = inlined_call_operand.hbm [shape: f32[2,8,32], index: 0, kind: input, shape index: {}]
  %s1 = inlined_call_operand.hbm [shape: bf16[32,96], index: 1, kind: input, shape index: {}]
  %s2 = inlined_call_operand.hbm [shape: f32[1,96], index: 2, kind: input, shape index: {}]
  %s3 = inlined_call_operand.vmem [shape: bf16[2,8,32], index: 3, kind: output, shape index: {0}]
  %s4 = inlined_call_operand.vmem [shape: bf16[2,8,64], index: 4, kind: output, shape index: {1}]
  %5 = xla_tuple %s3, %s4
  %s6 = sld [smem:[#allocation0]]
  $region65: #{causal_cross_cond_self_attention.2} parent=0
    _
  %s8 = ssub.s32 1, %s6
  %s9 = scalar_select 0, %s8, %s6
  $region1: #{causal_cross_cond_self_attention.2} parent=0
    #allocation2 [shape = 'u8[8192]{0}', space=vmem, size = 0x2000, scoped, tag = 'input window, operand 0']
    #allocation3 [shape = 's32[2]{0}', space=sflag, size = 0x8, scoped, tag = 'scoped memory for causal_cross_cond_self_attention.2']
    #allocation4 [shape = 'u8[8192]{0}', space=vmem, size = 0x2000, scoped, tag = 'input window, operand 1, single buffered']
    #allocation5 [shape = 's32[1]{0}', space=sflag, size = 0x4, scoped, tag = 'scoped memory for causal_cross_cond_self_attention.2']
    #allocation6 [shape = 'u8[512]{0}', space=vmem, size = 0x400, scoped, tag = 'input window, operand 2, single buffered']
    %10 = vsyncpa [#allocation3], 0
    %s11 = scalar_lea.sflag [#allocation3], 1
    %12 = vsyncpa %s11, 0
    %13 = vsyncpa [#allocation5], 0
    loop: start=0, step=1, limit=4
    $region2: #{causal_cross_cond_self_attention.2} parent=1 // loop_pre_header
      _
    $region3: #{causal_cross_cond_self_attention.2} parent=1 // loop_header
      %s15 = sphi 0, %s19
      %p16 = scmp.ge.s32.totalorder %s15, 4
      %s22 = sphi 0, %s34
      %s23 = sphi 0, %s30
      %s24 = sphi 0, %s22
      %s25 = sphi 0, %s23
      %s26 = sphi 0, %s24
      %s27 = sphi 0, %s25
      %s39 = sphi 0, %s41
      %s42 = sphi 0, %s39
      %s43 = sphi 0, %s42
      %s59 = sphi 0, %s43
      %s63 = sphi 0, %s63
      %s65 = sphi 0, %s63
      %s66 = sphi 0, %s65
      %s80 = sphi 0, %s66
      %s84 = sphi 0, %s84
      %s86 = sphi 0, %s84
      %s87 = sphi 0, %s86
      %s101 = sphi 0, %s87
      %s109 = sphi 0, %s111
      %s112 = sphi 0, %s109
      %s113 = sphi 0, %s112
      %s129 = sphi 0, %s113
      %s137 = sphi 0, %s139
      %s140 = sphi 0, %s137
      %s141 = sphi 0, %s140
      %s157 = sphi 0, %s141
    $region4: #{causal_cross_cond_self_attention.2} parent=1 // loop_header_branch
      %18 = sbr.rel (%p16) target = $region8
    $region5: #{causal_cross_cond_self_attention.2} parent=1 // loop_body
      %s20 = ssub.s32 %s15, 1
      %s21 = ssub.s32 %s15, 2
      %s28 = sadd.s32 1, %s23
      %p29 = scmp.ge.s32.totalorder %s28, 1
      %s30 = scalar_select %p29, 0, %s28
      %s31 = sadd.s32 1, %s22
      %s32 = scalar_select %p29, %s31, %s22
      %p33 = scmp.ge.s32.totalorder %s32, 2
      %s34 = scalar_select %p33, 0, %s32
      %s35 = ssub.s32 %s22, %s34
      %s36 = ssub.s32 %s23, %s30
      %s37 = sor.u32 %s35, %s36
      %p38 = scmp.eq.s32.totalorder %s37, 0
      %s40 = sadd.s32 %s39, 1
      %s41 = scalar_select %p38, %s39, %s40
      %p44 = pneg %p38
      %p45 = scmp.eq.s32.totalorder %s15, 1
      %p46 = por %p44, %p45
      %p47 = scmp.ne.s32.totalorder %s39, %s42
      %p48 = scmp.eq.s32.totalorder %s15, 0
      %p49 = por %p47, %p48
      %p50 = scmp.ne.s32.totalorder %s39, %s42
      %p51 = scmp.eq.s32.totalorder %s20, 1
      %p52 = por %p50, %p51
      %p53 = scmp.ne.s32.totalorder %s42, %s43
      %p54 = scmp.eq.s32.totalorder %s20, 0
      %p55 = por %p53, %p54
      %p56 = scmp.ne.s32.totalorder %s42, %s43
      %p57 = scmp.eq.s32.totalorder %s21, 1
      %p58 = por %p56, %p57
      %p60 = scmp.ne.s32.totalorder %s43, %s59
      %p61 = scmp.eq.s32.totalorder %s21, 0
      %p62 = por %p60, %p61
      %s64 = sadd.s32 %s63, 1
      %p67 = scmp.eq.s32.totalorder %s15, 1
      %p68 = scmp.ne.s32.totalorder %s63, %s65
      %p69 = scmp.eq.s32.totalorder %s15, 0
      %p70 = por %p68, %p69
      %p71 = scmp.ne.s32.totalorder %s63, %s65
      %p72 = scmp.eq.s32.totalorder %s20, 1
      %p73 = por %p71, %p72
      %p74 = scmp.ne.s32.totalorder %s65, %s66
      %p75 = scmp.eq.s32.totalorder %s20, 0
      %p76 = por %p74, %p75
      %p77 = scmp.ne.s32.totalorder %s65, %s66
      %p78 = scmp.eq.s32.totalorder %s21, 1
      %p79 = por %p77, %p78
      %p81 = scmp.ne.s32.totalorder %s66, %s80
      %p82 = scmp.eq.s32.totalorder %s21, 0
      %p83 = por %p81, %p82
      %s85 = sadd.s32 %s84, 1
      %p88 = scmp.eq.s32.totalorder %s15, 1
      %p89 = scmp.ne.s32.totalorder %s84, %s86
      %p90 = scmp.eq.s32.totalorder %s15, 0
      %p91 = por %p89, %p90
      %p92 = scmp.ne.s32.totalorder %s84, %s86
      %p93 = scmp.eq.s32.totalorder %s20, 1
      %p94 = por %p92, %p93
      %p95 = scmp.ne.s32.totalorder %s86, %s87
      %p96 = scmp.eq.s32.totalorder %s20, 0
      %p97 = por %p95, %p96
      %p98 = scmp.ne.s32.totalorder %s86, %s87
      %p99 = scmp.eq.s32.totalorder %s21, 1
      %p100 = por %p98, %p99
      %p102 = scmp.ne.s32.totalorder %s87, %s101
      %p103 = scmp.eq.s32.totalorder %s21, 0
      %p104 = por %p102, %p103
      %s105 = ssub.s32 %s22, %s34
      %s106 = ssub.s32 %s23, %s30
      %s107 = sor.u32 %s105, %s106
      %p108 = scmp.eq.s32.totalorder %s107, 0
      %s110 = sadd.s32 %s109, 1
      %s111 = scalar_select %p108, %s109, %s110
      %p114 = pneg %p108
      %p115 = scmp.eq.s32.totalorder %s15, 1
      %p116 = por %p114, %p115
      %p117 = scmp.ne.s32.totalorder %s109, %s112
      %p118 = scmp.eq.s32.totalorder %s15, 0
      %p119 = por %p117, %p118
      %p120 = scmp.ne.s32.totalorder %s109, %s112
      %p121 = scmp.eq.s32.totalorder %s20, 1
      %p122 = por %p120, %p121
      %p123 = scmp.ne.s32.totalorder %s112, %s113
      %p124 = scmp.eq.s32.totalorder %s20, 0
      %p125 = por %p123, %p124
      %p126 = scmp.ne.s32.totalorder %s112, %s113
      %p127 = scmp.eq.s32.totalorder %s21, 1
      %p128 = por %p126, %p127
      %p130 = scmp.ne.s32.totalorder %s113, %s129
      %p131 = scmp.eq.s32.totalorder %s21, 0
      %p132 = por %p130, %p131
      %s133 = ssub.s32 %s22, %s34
      %s134 = ssub.s32 %s23, %s30
      %s135 = sor.u32 %s133, %s134
      %p136 = scmp.eq.s32.totalorder %s135, 0
      %s138 = sadd.s32 %s137, 1
      %s139 = scalar_select %p136, %s137, %s138
      %p142 = pneg %p136
      %p143 = scmp.eq.s32.totalorder %s15, 1
      %p144 = por %p142, %p143
      %p145 = scmp.ne.s32.totalorder %s137, %s140
      %p146 = scmp.eq.s32.totalorder %s15, 0
      %p147 = por %p145, %p146
      %p148 = scmp.ne.s32.totalorder %s137, %s140
      %p149 = scmp.eq.s32.totalorder %s20, 1
      %p150 = por %p148, %p149
      %p151 = scmp.ne.s32.totalorder %s140, %s141
      %p152 = scmp.eq.s32.totalorder %s20, 0
      %p153 = por %p151, %p152
      %p154 = scmp.ne.s32.totalorder %s140, %s141
      %p155 = scmp.eq.s32.totalorder %s21, 1
      %p156 = por %p154, %p155
      %p158 = scmp.ne.s32.totalorder %s141, %s157
      %p159 = scmp.eq.s32.totalorder %s21, 0
      %p160 = por %p158, %p159
      %p161 = scmp.le.s32.totalorder 1, %s15
      %p162 = scmp.lt.s32.totalorder %s15, 3
      %p163 = pnand %p161, %p162
      %p164 = pneg %p163
      // Predicated region
      $region9: #{causal_cross_cond_self_attention.2} parent=5 // pred_check
        _
      $region10: #{causal_cross_cond_self_attention.2} parent=5 // pred_check_branch
        %166 = sbr.rel (%p163) target = $region12
      $region11: #{causal_cross_cond_self_attention.2} parent=5 // pred_region
        %s167 = ssub.s32 %s15, 1
        // Predicated region
        $region13: #{causal_cross_cond_self_attention.2} parent=11 // pred_check
          %p168 = pneg %p76
        $region14: #{causal_cross_cond_self_attention.2} parent=11 // pred_check_branch
          %170 = sbr.rel (%p168) target = $region16
        $region15: #{causal_cross_cond_self_attention.2} parent=11 // pred_region
          %172 = vsyncadd [#allocation5], 0
          %s173 = sshll.u32 %s1, 4
          %s174 = int_to_ptr.hbm [resolvable:$true] %s173
          %s175 = sshll.u32 [#allocation4], 4
          %s176 = int_to_ptr.vmem [resolvable:$true] %s175
          %181 = dma.hbm_to_vmem [thread:$0]  %s174, 256, %s176, [#allocation5], 64, 64, 4
        $region16: #{causal_cross_cond_self_attention.2} parent=11 // pred_fallthru
          _
        // Predicated region
        $region17: #{causal_cross_cond_self_attention.2} parent=11 // pred_check
          %p182 = pneg %p97
        $region18: #{causal_cross_cond_self_attention.2} parent=11 // pred_check_branch
          %184 = sbr.rel (%p182) target = $region20
        $region19: #{causal_cross_cond_self_attention.2} parent=11 // pred_region
          %186 = vsyncadd [#allocation5], 0
          %s188 = sshll.u32 %s2, 4
          %s189 = int_to_ptr.hbm [resolvable:$true] %s188
          %s190 = sshll.u32 [#allocation6], 4
          %s191 = int_to_ptr.vmem [resolvable:$true] %s190
          %193 = dma.hbm_to_vmem [thread:$0]  %s189, 16, %s191, [#allocation5]
        $region20: #{causal_cross_cond_self_attention.2} parent=11 // pred_fallthru
          _
      $region12: #{causal_cross_cond_self_attention.2} parent=5 // pred_fallthru
        _
      %p194 = scmp.lt.s32.totalorder %s15, 2
      // Predicated region
      $region21: #{causal_cross_cond_self_attention.2} parent=5 // pred_check
        %p195 = pneg %p194
      $region22: #{causal_cross_cond_self_attention.2} parent=5 // pred_check_branch
        %197 = sbr.rel (%p195) target = $region24
      $region23: #{causal_cross_cond_self_attention.2} parent=5 // pred_region
        // Predicated region
        $region25: #{causal_cross_cond_self_attention.2} parent=23 // pred_check
          %p198 = pneg %p49
        $region26: #{causal_cross_cond_self_attention.2} parent=23 // pred_check_branch
          %200 = sbr.rel (%p198) target = $region28
        $region27: #{causal_cross_cond_self_attention.2} parent=23 // pred_region
          %s201 = sand.u32 %s39, 1
          %s202 = scalar_lea.sflag [#allocation3], %s201
          %s203 = sand.u32 %s39, 1
          %s204 = smul.addr %s203, 8
          %s205 = scalar_lea.vmem [#allocation2], %s204
          %207 = vsyncadd %s202, 0
          %s208 = sadd.s32 %s23, %s22
          %s209 = smul.addr %s208, 8
          %s210 = scalar_lea.hbm %s0, %s209
          %s212 = sshll.u32 %s210, 4
          %s213 = int_to_ptr.hbm [resolvable:$true] %s212
          %s214 = sshll.u32 %s205, 4
          %s215 = int_to_ptr.vmem [resolvable:$true] %s214
          %217 = dma.hbm_to_vmem [thread:$0]  %s213, 128, %s215, %s202
        $region28: #{causal_cross_cond_self_attention.2} parent=23 // pred_fallthru
          _
      $region24: #{causal_cross_cond_self_attention.2} parent=5 // pred_fallthru
        _
      %p218 = scmp.le.s32.totalorder 1, %s15
      %p219 = scmp.lt.s32.totalorder %s15, 3
      %p220 = pnand %p218, %p219
      %p221 = pneg %p220
      // Predicated region
      $region29: #{causal_cross_cond_self_attention.2} parent=5 // pred_check
        _
      $region30: #{causal_cross_cond_self_attention.2} parent=5 // pred_check_branch
        %223 = sbr.rel (%p220) target = $region32
      $region31: #{causal_cross_cond_self_attention.2} parent=5 // pred_region
        %s224 = ssub.s32 %s15, 1
        %s225 = sand.u32 %s42, 1
        %s226 = scalar_lea.sflag [#allocation3], %s225
        %s227 = sand.u32 %s42, 1
        %s228 = smul.addr %s227, 8
        %s229 = scalar_lea.vmem [#allocation2], %s228
        // Predicated region
        $region33: #{causal_cross_cond_self_attention.2} parent=31 // pred_check
          %p230 = pneg %p55
        $region34: #{causal_cross_cond_self_attention.2} parent=31 // pred_check_branch
          %232 = sbr.rel (%p230) target = $region36
        $region35: #{causal_cross_cond_self_attention.2} parent=31 // pred_region
          %234 = dma.done %s226, 128
        $region36: #{causal_cross_cond_self_attention.2} parent=31 // pred_fallthru
          _
        // Predicated region
        $region37: #{causal_cross_cond_self_attention.2} parent=31 // pred_check
          %p235 = pneg %p76
        $region38: #{causal_cross_cond_self_attention.2} parent=31 // pred_check_branch
          %237 = sbr.rel (%p235) target = $region40
        $region39: #{causal_cross_cond_self_attention.2} parent=31 // pred_region
          %239 = dma.done [#allocation5], 256
        $region40: #{causal_cross_cond_self_attention.2} parent=31 // pred_fallthru
          _
        // Predicated region
        $region41: #{causal_cross_cond_self_attention.2} parent=31 // pred_check
          %p240 = pneg %p97
        $region42: #{causal_cross_cond_self_attention.2} parent=31 // pred_check_branch
          %242 = sbr.rel (%p240) target = $region44
        $region43: #{causal_cross_cond_self_attention.2} parent=31 // pred_region
          %244 = dma.done [#allocation5], 16
        $region44: #{causal_cross_cond_self_attention.2} parent=31 // pred_fallthru
          _
        %s245 = sand.u32 %s42, 1
        %s246 = scalar_lea.sflag [#allocation3], %s245
        %s247 = sand.u32 %s42, 1
        %s248 = smul.addr %s247, 8
        %s249 = scalar_lea.vmem [#allocation2], %s248
        %p250 = pneg %p55
        %p251 = pneg %p52
        %p252 = pneg %p76
        %p253 = pneg %p73
        %p254 = pneg %p97
        %p255 = pneg %p94
        %p256 = pneg %p125
        %p257 = pneg %p122
        %p258 = scmp.lt.s32.totalorder %s24, 1
        %s259 = scalar_select %p258, %s24, 1
        %p260 = scmp.lt.s32.totalorder %s25, 0
        %s261 = scalar_select %p260, %s25, 0
        %s262 = sadd.s32 %s261, %s259
        %s263 = smul.addr %s262, 4
        %s264 = scalar_lea.vmem %s3, %s263
        %p265 = pneg %p153
        %p266 = pneg %p150
        %p267 = scmp.lt.s32.totalorder %s24, 1
        %s268 = scalar_select %p267, %s24, 1
        %p269 = scmp.lt.s32.totalorder %s25, 0
        %s270 = scalar_select %p269, %s25, 0
        %s271 = sadd.s32 %s270, %s268
        %s272 = smul.addr %s271, 4
        %s273 = scalar_lea.vmem %s4, %s272
        %p274 = scmp.lt.s32.totalorder %s24, 1
        %s275 = scalar_select %p274, %s24, 1
        %p276 = scmp.lt.s32.totalorder %s25, 0
        %s277 = scalar_select %p276, %s25, 0
        %s278 = sadd.s32 %s277, %s275
        %s279 = smul.addr %s278, 4
        %s280 = scalar_lea.vmem %s3, %s279
        %p281 = scmp.lt.s32.totalorder %s24, 1
        %s282 = scalar_select %p281, %s24, 1
        %p283 = scmp.lt.s32.totalorder %s25, 0
        %s284 = scalar_select %p283, %s25, 0
        %s285 = sadd.s32 %s284, %s282
        %s286 = smul.addr %s285, 4
        %s287 = scalar_lea.vmem %s4, %s286
        %v289 = vld [vmem:[%s229] sm:$0xff]
        %v290 = vpack.c.bf16 %v289, %v289
        %v291 = vld [vmem:[#allocation4] sm:$0xf]
        %v292 = vld [vmem:[#allocation4 + $0x4] sm:$0xf]
        %v293 = vld [vmem:[#allocation4 + $0x8] sm:$0xf]
        %v294 = vld [vmem:[#allocation4 + $0xc] sm:$0xf]
        %v295 = vld [vmem:[#allocation6] sm:$0x1]
        %v297 = vperm.slane %v295, 0
        %v303 = vunpack.c.l.b16 %v291
        %v304 = vunpack.c.l.b16 %v292
        %v305 = vunpack.c.l.b16 %v293
        %v306 = vunpack.c.l.b16 %v294
        %v307 = vpack.c.b16 %v304, %v303
        %v308 = vpack.c.b16 %v306, %v305
        %vm311 = vcmask 261120
        %v313 = vsel %vm311, %v290, 0
        %315 = vmatpush.bf16.msra.mxu0 0
        %316 = vmatpush.bf16.msra.mxu0 0
        %317 = vmatpush.bf16.msra.mxu0 0
        %318 = vmatpush.bf16.msra.mxu0 0
        %319 = vmatpush.bf16.msra.mxu0 0
        %320 = vmatpush.bf16.msra.mxu0 0
        %321 = vmatpush.bf16.msra.mxu0 %v308
        %322 = vmatpush.bf16.msra.mxu0 %v307
        %323 = vmatmul.bf16.gmra.mxu0 %v313
        %v324 = vpop.f32.mrf.mxu0
        %v325 = vadd.f32 %v297, %v324
        %v326 = vpop.f32.mrf.mxu0
        %327 = vdwg.mxu0
        %v328 = vpack.c.bf16 %v325, %v325
        %vm329 = vcmask 257024
        %330 = vst.msk [vmem:[%s280] sm:$0xf] %vm329, %v328
        %332 = vrot.lane.b32.xlu0 %v328, 96
        %v333 = vpop.permute.xlu0 %332
        %vm335 = vcmask 519168
        %336 = vst.msk [vmem:[%s287] sm:$0xf] %vm335, %v333
        %p337 = scmp.lt.s32.totalorder %s24, 1
        %s338 = scalar_select %p337, %s24, 1
        %p339 = scmp.lt.s32.totalorder %s25, 0
        %s340 = scalar_select %p339, %s25, 0
        %s341 = sadd.s32 %s340, %s338
        %s342 = smul.addr %s341, 4
        %s343 = scalar_lea.vmem %s3, %s342
        %p344 = scmp.lt.s32.totalorder %s24, 1
        %s345 = scalar_select %p344, %s24, 1
        %p346 = scmp.lt.s32.totalorder %s25, 0
        %s347 = scalar_select %p346, %s25, 0
        %s348 = sadd.s32 %s347, %s345
        %s349 = smul.addr %s348, 4
        %s350 = scalar_lea.vmem %s4, %s349
        // Predicated region
        $region45: #{causal_cross_cond_self_attention.2} parent=31 // pred_check
          %p351 = pneg %p122
        $region46: #{causal_cross_cond_self_attention.2} parent=31 // pred_check_branch
          %353 = sbr.rel (%p351) target = $region48
        $region47: #{causal_cross_cond_self_attention.2} parent=31 // pred_region
          _
        $region48: #{causal_cross_cond_self_attention.2} parent=31 // pred_fallthru
          _
        // Predicated region
        $region49: #{causal_cross_cond_self_attention.2} parent=31 // pred_check
          %p354 = pneg %p150
        $region50: #{causal_cross_cond_self_attention.2} parent=31 // pred_check_branch
          %356 = sbr.rel (%p354) target = $region52
        $region51: #{causal_cross_cond_self_attention.2} parent=31 // pred_region
          _
        $region52: #{causal_cross_cond_self_attention.2} parent=31 // pred_fallthru
          _
      $region32: #{causal_cross_cond_self_attention.2} parent=5 // pred_fallthru
        _
      %p357 = scmp.le.s32.totalorder 2, %s15
      // Predicated region
      $region53: #{causal_cross_cond_self_attention.2} parent=5 // pred_check
        %p358 = pneg %p357
      $region54: #{causal_cross_cond_self_attention.2} parent=5 // pred_check_branch
        %360 = sbr.rel (%p358) target = $region56
      $region55: #{causal_cross_cond_self_attention.2} parent=5 // pred_region
        %s361 = ssub.s32 %s15, 2
        // Predicated region
        $region57: #{causal_cross_cond_self_attention.2} parent=55 // pred_check
          %p362 = pneg %p128
        $region58: #{causal_cross_cond_self_attention.2} parent=55 // pred_check_branch
          %364 = sbr.rel (%p362) target = $region60
        $region59: #{causal_cross_cond_self_attention.2} parent=55 // pred_region
          %p365 = scmp.lt.s32.totalorder %s26, 1
          %s366 = scalar_select %p365, %s26, 1
          %p367 = scmp.lt.s32.totalorder %s27, 0
          %s368 = scalar_select %p367, %s27, 0
          %s369 = sadd.s32 %s368, %s366
          %s370 = smul.addr %s369, 4
          %s371 = scalar_lea.vmem %s3, %s370
        $region60: #{causal_cross_cond_self_attention.2} parent=55 // pred_fallthru
          _
        // Predicated region
        $region61: #{causal_cross_cond_self_attention.2} parent=55 // pred_check
          %p372 = pneg %p156
        $region62: #{causal_cross_cond_self_attention.2} parent=55 // pred_check_branch
          %374 = sbr.rel (%p372) target = $region64
        $region63: #{causal_cross_cond_self_attention.2} parent=55 // pred_region
          %p375 = scmp.lt.s32.totalorder %s26, 1
          %s376 = scalar_select %p375, %s26, 1
          %p377 = scmp.lt.s32.totalorder %s27, 0
          %s378 = scalar_select %p377, %s27, 0
          %s379 = sadd.s32 %s378, %s376
          %s380 = smul.addr %s379, 4
          %s381 = scalar_lea.vmem %s4, %s380
        $region64: #{causal_cross_cond_self_attention.2} parent=55 // pred_fallthru
          _
      $region56: #{causal_cross_cond_self_attention.2} parent=5 // pred_fallthru
        _
    $region6: #{causal_cross_cond_self_attention.2} parent=1 // loop_footer
      %s19 = sadd.s32 1, %s15
    $region7: #{causal_cross_cond_self_attention.2} parent=1 // loop_footer_branch
      %14 = sbr.rel target = $region3
    $region8: #{causal_cross_cond_self_attention.2} parent=1 // loop_exit
      _
    %382 = vsyncpa [#allocation3], 1
    %s383 = scalar_lea.sflag [#allocation3], 1
    %384 = vsyncpa %s383, 1
    %385 = vsyncpa [#allocation5], 1

// kernel: causal_cross_cond_self_attention.3
$region0: #{causal_cross_cond_self_attention.3}
  #allocation0 [shape = 'u32[]', space=smem, size = 0x4, offset = 0x4, fixed_abs, tag = 'smem constant byte address 0x4 - core index']
  #allocation1 [shape = 'u32[72,128]{1,0:T(1,128)}', space=vmem, size = 0x9000, scoped, tag = 'internal scratch']
  #allocation2 [shape = 'f32[4,8,1]{2,1,0:T(8,128)}', space=vmem, size = 0x4000, scoped, tag = 'scratch operand']
  #allocation3 [shape = 'f32[4,8,1]{2,1,0:T(8,128)}', space=vmem, size = 0x4000, scoped, tag = 'scratch operand']
  #allocation4 [shape = 'f32[4,8,8]{2,1,0:T(8,128)}', space=vmem, size = 0x4000, scoped, tag = 'scratch operand']
  %s0 = inlined_call_operand.vmem [shape: bf16[2,8,32], index: 0, kind: input, shape index: {}]
  %s1 = inlined_call_operand.vmem [shape: bf16[2,8,64], index: 1, kind: input, shape index: {}]
  %s2 = inlined_call_operand.hbm [shape: bf16[32,32], index: 2, kind: input, shape index: {}]
  %s3 = inlined_call_operand.vmem [shape: f32[1,32], index: 3, kind: input, shape index: {}]
  %s4 = inlined_call_operand.hbm [shape: f32[2,8,32], index: 4, kind: output, shape index: {}]
  %s5 = sld [smem:[#allocation0]]
  $region65: #{causal_cross_cond_self_attention.3} parent=0
    _
  %s7 = ssub.s32 1, %s5
  %s8 = scalar_select 0, %s7, %s5
  $region1: #{causal_cross_cond_self_attention.3} parent=0
    #allocation5 [shape = 'u8[8192]{0}', space=vmem, size = 0x2000, scoped, tag = 'input window, operand 2, single buffered']
    #allocation6 [shape = 's32[2]{0}', space=sflag, size = 0x8, scoped, tag = 'scoped memory for causal_cross_cond_self_attention.3']
    #allocation7 [shape = 's32[2]{0}', space=sflag, size = 0x8, scoped, tag = 'scoped memory for causal_cross_cond_self_attention.3']
    #allocation8 [shape = 'u8[8192]{0}', space=vmem, size = 0x2000, scoped, tag = 'output window, operand 0']
    %9 = vsyncpa [#allocation6], 0
    %10 = vsyncpa [#allocation7], 0
    %s11 = scalar_lea.sflag [#allocation7], 1
    %12 = vsyncpa %s11, 0
    loop: start=0, step=1, limit=4
    $region2: #{causal_cross_cond_self_attention.3} parent=1 // loop_pre_header
      _
    $region3: #{causal_cross_cond_self_attention.3} parent=1 // loop_header
      %s14 = sphi 0, %s18
      %p15 = scmp.ge.s32.totalorder %s14, 4
      %s21 = sphi 0, %s40
      %s22 = sphi 0, %s36
      %s23 = sphi 0, %s32
      %s24 = sphi 0, %s21
      %s25 = sphi 0, %s22
      %s26 = sphi 0, %s23
      %s27 = sphi 0, %s24
      %s28 = sphi 0, %s25
      %s29 = sphi 0, %s26
      %s45 = sphi 0, %s47
      %s48 = sphi 0, %s45
      %s49 = sphi 0, %s48
      %s65 = sphi 0, %s49
      %s77 = sphi 0, %s79
      %s80 = sphi 0, %s77
      %s81 = sphi 0, %s80
      %s97 = sphi 0, %s81
      %s101 = sphi 0, %s101
      %s103 = sphi 0, %s101
      %s104 = sphi 0, %s103
      %s118 = sphi 0, %s104
      %s122 = sphi 0, %s122
      %s124 = sphi 0, %s122
      %s125 = sphi 0, %s124
      %s139 = sphi 0, %s125
      %s147 = sphi 0, %s149
      %s150 = sphi 0, %s147
      %s151 = sphi 0, %s150
      %s167 = sphi 0, %s151
    $region4: #{causal_cross_cond_self_attention.3} parent=1 // loop_header_branch
      %17 = sbr.rel (%p15) target = $region8
    $region5: #{causal_cross_cond_self_attention.3} parent=1 // loop_body
      %s19 = ssub.s32 %s14, 1
      %s20 = ssub.s32 %s14, 2
      %s30 = sadd.s32 1, %s23
      %p31 = scmp.ge.s32.totalorder %s30, 1
      %s32 = scalar_select %p31, 0, %s30
      %s33 = sadd.s32 1, %s22
      %s34 = scalar_select %p31, %s33, %s22
      %p35 = scmp.ge.s32.totalorder %s34, 1
      %s36 = scalar_select %p35, 0, %s34
      %s37 = sadd.s32 1, %s21
      %s38 = scalar_select %p35, %s37, %s21
      %p39 = scmp.ge.s32.totalorder %s38, 2
      %s40 = scalar_select %p39, 0, %s38
      %s41 = ssub.s32 %s21, %s40
      %s42 = ssub.s32 %s22, %s36
      %s43 = sor.u32 %s41, %s42
      %p44 = scmp.eq.s32.totalorder %s43, 0
      %s46 = sadd.s32 %s45, 1
      %s47 = scalar_select %p44, %s45, %s46
      %p50 = pneg %p44
      %p51 = scmp.eq.s32.totalorder %s14, 1
      %p52 = por %p50, %p51
      %p53 = scmp.ne.s32.totalorder %s45, %s48
      %p54 = scmp.eq.s32.totalorder %s14, 0
      %p55 = por %p53, %p54
      %p56 = scmp.ne.s32.totalorder %s45, %s48
      %p57 = scmp.eq.s32.totalorder %s19, 1
      %p58 = por %p56, %p57
      %p59 = scmp.ne.s32.totalorder %s48, %s49
      %p60 = scmp.eq.s32.totalorder %s19, 0
      %p61 = por %p59, %p60
      %p62 = scmp.ne.s32.totalorder %s48, %s49
      %p63 = scmp.eq.s32.totalorder %s20, 1
      %p64 = por %p62, %p63
      %p66 = scmp.ne.s32.totalorder %s49, %s65
      %p67 = scmp.eq.s32.totalorder %s20, 0
      %p68 = por %p66, %p67
      %p69 = scmp.lt.s32.totalorder %s23, %s22
      %s70 = scalar_select %p69, %s23, %s22
      %p71 = scmp.lt.s32.totalorder %s32, %s36
      %s72 = scalar_select %p71, %s32, %s36
      %s73 = ssub.s32 %s21, %s40
      %s74 = ssub.s32 %s70, %s72
      %s75 = sor.u32 %s73, %s74
      %p76 = scmp.eq.s32.totalorder %s75, 0
      %s78 = sadd.s32 %s77, 1
      %s79 = scalar_select %p76, %s77, %s78
      %p82 = pneg %p76
      %p83 = scmp.eq.s32.totalorder %s14, 1
      %p84 = por %p82, %p83
      %p85 = scmp.ne.s32.totalorder %s77, %s80
      %p86 = scmp.eq.s32.totalorder %s14, 0
      %p87 = por %p85, %p86
      %p88 = scmp.ne.s32.totalorder %s77, %s80
      %p89 = scmp.eq.s32.totalorder %s19, 1
      %p90 = por %p88, %p89
      %p91 = scmp.ne.s32.totalorder %s80, %s81
      %p92 = scmp.eq.s32.totalorder %s19, 0
      %p93 = por %p91, %p92
      %p94 = scmp.ne.s32.totalorder %s80, %s81
      %p95 = scmp.eq.s32.totalorder %s20, 1
      %p96 = por %p94, %p95
      %p98 = scmp.ne.s32.totalorder %s81, %s97
      %p99 = scmp.eq.s32.totalorder %s20, 0
      %p100 = por %p98, %p99
      %s102 = sadd.s32 %s101, 1
      %p105 = scmp.eq.s32.totalorder %s14, 1
      %p106 = scmp.ne.s32.totalorder %s101, %s103
      %p107 = scmp.eq.s32.totalorder %s14, 0
      %p108 = por %p106, %p107
      %p109 = scmp.ne.s32.totalorder %s101, %s103
      %p110 = scmp.eq.s32.totalorder %s19, 1
      %p111 = por %p109, %p110
      %p112 = scmp.ne.s32.totalorder %s103, %s104
      %p113 = scmp.eq.s32.totalorder %s19, 0
      %p114 = por %p112, %p113
      %p115 = scmp.ne.s32.totalorder %s103, %s104
      %p116 = scmp.eq.s32.totalorder %s20, 1
      %p117 = por %p115, %p116
      %p119 = scmp.ne.s32.totalorder %s104, %s118
      %p120 = scmp.eq.s32.totalorder %s20, 0
      %p121 = por %p119, %p120
      %s123 = sadd.s32 %s122, 1
      %p126 = scmp.eq.s32.totalorder %s14, 1
      %p127 = scmp.ne.s32.totalorder %s122, %s124
      %p128 = scmp.eq.s32.totalorder %s14, 0
      %p129 = por %p127, %p128
      %p130 = scmp.ne.s32.totalorder %s122, %s124
      %p131 = scmp.eq.s32.totalorder %s19, 1
      %p132 = por %p130, %p131
      %p133 = scmp.ne.s32.totalorder %s124, %s125
      %p134 = scmp.eq.s32.totalorder %s19, 0
      %p135 = por %p133, %p134
      %p136 = scmp.ne.s32.totalorder %s124, %s125
      %p137 = scmp.eq.s32.totalorder %s20, 1
      %p138 = por %p136, %p137
      %p140 = scmp.ne.s32.totalorder %s125, %s139
      %p141 = scmp.eq.s32.totalorder %s20, 0
      %p142 = por %p140, %p141
      %s143 = ssub.s32 %s21, %s40
      %s144 = ssub.s32 %s22, %s36
      %s145 = sor.u32 %s143, %s144
      %p146 = scmp.eq.s32.totalorder %s145, 0
      %s148 = sadd.s32 %s147, 1
      %s149 = scalar_select %p146, %s147, %s148
      %p152 = pneg %p146
      %p153 = scmp.eq.s32.totalorder %s14, 1
      %p154 = por %p152, %p153
      %p155 = scmp.ne.s32.totalorder %s147, %s150
      %p156 = scmp.eq.s32.totalorder %s14, 0
      %p157 = por %p155, %p156
      %p158 = scmp.ne.s32.totalorder %s147, %s150
      %p159 = scmp.eq.s32.totalorder %s19, 1
      %p160 = por %p158, %p159
      %p161 = scmp.ne.s32.totalorder %s150, %s151
      %p162 = scmp.eq.s32.totalorder %s19, 0
      %p163 = por %p161, %p162
      %p164 = scmp.ne.s32.totalorder %s150, %s151
      %p165 = scmp.eq.s32.totalorder %s20, 1
      %p166 = por %p164, %p165
      %p168 = scmp.ne.s32.totalorder %s151, %s167
      %p169 = scmp.eq.s32.totalorder %s20, 0
      %p170 = por %p168, %p169
      %p171 = scmp.le.s32.totalorder 1, %s14
      %p172 = scmp.lt.s32.totalorder %s14, 3
      %p173 = pnand %p171, %p172
      %p174 = pneg %p173
      // Predicated region
      $region9: #{causal_cross_cond_self_attention.3} parent=5 // pred_check
        _
      $region10: #{causal_cross_cond_self_attention.3} parent=5 // pred_check_branch
        %176 = sbr.rel (%p173) target = $region12
      $region11: #{causal_cross_cond_self_attention.3} parent=5 // pred_region
        %s177 = ssub.s32 %s14, 1
        // Predicated region
        $region13: #{causal_cross_cond_self_attention.3} parent=11 // pred_check
          %p178 = pneg %p114
        $region14: #{causal_cross_cond_self_attention.3} parent=11 // pred_check_branch
          %180 = sbr.rel (%p178) target = $region16
        $region15: #{causal_cross_cond_self_attention.3} parent=11 // pred_region
          %182 = vsyncadd [#allocation6], 0
          %s183 = sshll.u32 %s2, 4
          %s184 = int_to_ptr.hbm [resolvable:$true] %s183
          %s185 = sshll.u32 [#allocation5], 4
          %s186 = int_to_ptr.vmem [resolvable:$true] %s185
          %191 = dma.hbm_to_vmem [thread:$0]  %s184, 256, %s186, [#allocation6], 64, 64, 4
        $region16: #{causal_cross_cond_self_attention.3} parent=11 // pred_fallthru
          _
        // Predicated region
        $region17: #{causal_cross_cond_self_attention.3} parent=11 // pred_check
          %p192 = pneg %p135
        $region18: #{causal_cross_cond_self_attention.3} parent=11 // pred_check_branch
          %194 = sbr.rel (%p192) target = $region20
        $region19: #{causal_cross_cond_self_attention.3} parent=11 // pred_region
          _
        $region20: #{causal_cross_cond_self_attention.3} parent=11 // pred_fallthru
          _
      $region12: #{causal_cross_cond_self_attention.3} parent=5 // pred_fallthru
        _
      %p195 = scmp.lt.s32.totalorder %s14, 2
      // Predicated region
      $region21: #{causal_cross_cond_self_attention.3} parent=5 // pred_check
        %p196 = pneg %p195
      $region22: #{causal_cross_cond_self_attention.3} parent=5 // pred_check_branch
        %198 = sbr.rel (%p196) target = $region24
      $region23: #{causal_cross_cond_self_attention.3} parent=5 // pred_region
        // Predicated region
        $region25: #{causal_cross_cond_self_attention.3} parent=23 // pred_check
          %p199 = pneg %p55
        $region26: #{causal_cross_cond_self_attention.3} parent=23 // pred_check_branch
          %201 = sbr.rel (%p199) target = $region28
        $region27: #{causal_cross_cond_self_attention.3} parent=23 // pred_region
          %p202 = scmp.lt.s32.totalorder %s21, 1
          %s203 = scalar_select %p202, %s21, 1
          %p204 = scmp.lt.s32.totalorder %s22, 0
          %s205 = scalar_select %p204, %s22, 0
          %s206 = sadd.s32 %s205, %s203
          %s207 = smul.addr %s206, 4
          %s208 = scalar_lea.vmem %s0, %s207
        $region28: #{causal_cross_cond_self_attention.3} parent=23 // pred_fallthru
          _
        // Predicated region
        $region29: #{causal_cross_cond_self_attention.3} parent=23 // pred_check
          %p209 = pneg %p87
        $region30: #{causal_cross_cond_self_attention.3} parent=23 // pred_check_branch
          %211 = sbr.rel (%p209) target = $region32
        $region31: #{causal_cross_cond_self_attention.3} parent=23 // pred_region
          %p212 = scmp.lt.s32.totalorder %s23, %s22
          %s213 = scalar_select %p212, %s23, %s22
          %p214 = scmp.lt.s32.totalorder %s21, 1
          %s215 = scalar_select %p214, %s21, 1
          %p216 = scmp.lt.s32.totalorder %s213, 0
          %s217 = scalar_select %p216, %s213, 0
          %s218 = sadd.s32 %s217, %s215
          %s219 = smul.addr %s218, 4
          %s220 = scalar_lea.vmem %s1, %s219
          %p221 = scmp.lt.s32.totalorder %s23, %s22
          %s222 = scalar_select %p221, %s23, %s22
        $region32: #{causal_cross_cond_self_attention.3} parent=23 // pred_fallthru
          _
      $region24: #{causal_cross_cond_self_attention.3} parent=5 // pred_fallthru
        _
      %p223 = scmp.le.s32.totalorder 1, %s14
      %p224 = scmp.lt.s32.totalorder %s14, 3
      %p225 = pnand %p223, %p224
      %p226 = pneg %p225
      // Predicated region
      $region33: #{causal_cross_cond_self_attention.3} parent=5 // pred_check
        _
      $region34: #{causal_cross_cond_self_attention.3} parent=5 // pred_check_branch
        %228 = sbr.rel (%p225) target = $region36
      $region35: #{causal_cross_cond_self_attention.3} parent=5 // pred_region
        %s229 = ssub.s32 %s14, 1
        // Predicated region
        $region37: #{causal_cross_cond_self_attention.3} parent=35 // pred_check
          %p230 = pneg %p114
        $region38: #{causal_cross_cond_self_attention.3} parent=35 // pred_check_branch
          %232 = sbr.rel (%p230) target = $region40
        $region39: #{causal_cross_cond_self_attention.3} parent=35 // pred_region
          %234 = dma.done [#allocation6], 256
        $region40: #{causal_cross_cond_self_attention.3} parent=35 // pred_fallthru
          _
        %p235 = scmp.lt.s32.totalorder %s24, 1
        %s236 = scalar_select %p235, %s24, 1
        %p237 = scmp.lt.s32.totalorder %s25, 0
        %s238 = scalar_select %p237, %s25, 0
        %s239 = sadd.s32 %s238, %s236
        %s240 = smul.addr %s239, 4
        %s241 = scalar_lea.vmem %s0, %s240
        %p242 = pneg %p61
        %p243 = pneg %p58
        %p244 = scmp.lt.s32.totalorder %s26, %s25
        %s245 = scalar_select %p244, %s26, %s25
        %p246 = scmp.lt.s32.totalorder %s24, 1
        %s247 = scalar_select %p246, %s24, 1
        %p248 = scmp.lt.s32.totalorder %s245, 0
        %s249 = scalar_select %p248, %s245, 0
        %s250 = sadd.s32 %s249, %s247
        %s251 = smul.addr %s250, 4
        %s252 = scalar_lea.vmem %s1, %s251
        %p253 = pneg %p93
        %p254 = pneg %p90
        %p255 = pneg %p114
        %p256 = pneg %p111
        %p257 = pneg %p135
        %p258 = pneg %p132
        %p259 = pneg %p163
        %p260 = pneg %p160
        %s261 = sand.u32 %s150, 1
        %s262 = scalar_lea.sflag [#allocation7], %s261
        %s263 = sand.u32 %s150, 1
        %s264 = smul.addr %s263, 8
        %s265 = scalar_lea.vmem [#allocation8], %s264
        %p266 = scmp.lt.s32.totalorder %s24, 1
        %s267 = scalar_select %p266, %s24, 1
        %p268 = scmp.lt.s32.totalorder %s25, 0
        %s269 = scalar_select %p268, %s25, 0
        %s270 = sadd.s32 %s269, %s267
        %s271 = smul.addr %s270, 4
        %s272 = scalar_lea.vmem %s0, %s271
        %p273 = scmp.lt.s32.totalorder %s26, %s25
        %s274 = scalar_select %p273, %s26, %s25
        %p275 = scmp.lt.s32.totalorder %s24, 1
        %s276 = scalar_select %p275, %s24, 1
        %p277 = scmp.lt.s32.totalorder %s274, 0
        %s278 = scalar_select %p277, %s274, 0
        %s279 = sadd.s32 %s278, %s276
        %s280 = smul.addr %s279, 4
        %s281 = scalar_lea.vmem %s1, %s280
        %p282 = scmp.lt.s32.totalorder %s26, %s25
        %s283 = scalar_select %p282, %s26, %s25
        %p285 = scmp.eq.s32.totalorder %s26, 0
        // Predicated region
        $region41: #{causal_cross_cond_self_attention.3} parent=35 // pred_check
          %p286 = pneg %p285
        $region42: #{causal_cross_cond_self_attention.3} parent=35 // pred_check_branch
          %288 = sbr.rel (%p286) target = $region44
        $region43: #{causal_cross_cond_self_attention.3} parent=35 // pred_region
          %vm289 = vcmask 7168
          %290 = vst.msk [vmem:[#allocation2] sm:$0xff] %vm289, -1e+30
          %291 = vst.msk [vmem:[#allocation2 + $0x8] sm:$0xff] %vm289, -1e+30
          %292 = vst.msk [vmem:[#allocation2 + $0x10] sm:$0xff] %vm289, -1e+30
          %293 = vst.msk [vmem:[#allocation2 + $0x18] sm:$0xff] %vm289, -1e+30
          %294 = vst.msk [vmem:[#allocation3] sm:$0xff] %vm289, 0.0
          %295 = vst.msk [vmem:[#allocation3 + $0x8] sm:$0xff] %vm289, 0.0
          %296 = vst.msk [vmem:[#allocation3 + $0x10] sm:$0xff] %vm289, 0.0
          %297 = vst.msk [vmem:[#allocation3 + $0x18] sm:$0xff] %vm289, 0.0
          %vm298 = vcmask 64512
          %299 = vst.msk [vmem:[#allocation4] sm:$0xff] %vm298, 0.0
          %300 = vst.msk [vmem:[#allocation4 + $0x8] sm:$0xff] %vm298, 0.0
          %301 = vst.msk [vmem:[#allocation4 + $0x10] sm:$0xff] %vm298, 0.0
          %302 = vst.msk [vmem:[#allocation4 + $0x18] sm:$0xff] %vm298, 0.0
        $region44: #{causal_cross_cond_self_attention.3} parent=35 // pred_fallthru
          _
        %p303 = scmp.le.s32.totalorder %s26, %s25
        // Predicated region
        $region45: #{causal_cross_cond_self_attention.3} parent=35 // pred_check
          %p304 = pneg %p303
        $region46: #{causal_cross_cond_self_attention.3} parent=35 // pred_check_branch
          %306 = sbr.rel (%p304) target = $region48
        $region47: #{causal_cross_cond_self_attention.3} parent=35 // pred_region
          %v307 = vld [vmem:[%s272] sm:$0xf]
          %v308 = vld [vmem:[%s281] sm:$0xf]
          %s309 = smul.u32 %s25, 8
          %v310 = vlaneseq
          %v311 = vshrl.u32 %v310, 7
          %v312 = vstv %s309
          %v313 = vadd.s32 %v312, %v311
          %s314 = smul.u32 %s26, 8
          %v315 = vlaneseq
          %v316 = vand.u32 %v315, 127
          %v317 = vstv %s314
          %v318 = vadd.s32 %v317, %v316
          %vm319 = vcmp.le.s32.totalorder %v318, %v313
          %v320 = vsel %vm319, 0.0, -1e+30
          %vm321 = vcmask 64512
          %v323 = vsel %vm321, %v307, 0
          %v326 = vsel %vm321, %v308, 0
          %328 = vmatpush.bf16.xpose.msra.mxu0 0
          %329 = vmatpush.bf16.xpose.msra.mxu0 0
          %330 = vmatpush.bf16.xpose.msra.mxu0 0
          %331 = vmatpush.bf16.xpose.msra.mxu0 0
          %332 = vmatpush.bf16.xpose.msra.mxu0 0
          %333 = vmatpush.bf16.xpose.msra.mxu0 0
          %334 = vmatpush.bf16.xpose.msra.mxu0 0
          %335 = vmatpush.bf16.xpose.msra.mxu0 %v326
          %336 = vmatmul.bf16.gmra.mxu0 %v323
          %v337 = vpop.f32.mrf.mxu0
          %v338 = vadd.f32 0.0, %v337
          %v339 = vpop.f32.mrf.mxu0
          %340 = vdwg.mxu0
          %v341 = vmul.f32 %v338, 0.35355338
          %v342 = vadd.f32 %v341, %v320
          %v343 = vld [vmem:[#allocation2] sm:$0xff]
          %v344 = vsel %vm321, %v342, -inf
          %345 = vmax.xlane.f32.xlu0 %v344
          %v346 = vpop.xlane.xlu0 %345
          %v347 = vmax.f32 %v343, %v346
          %v348 = vsub.f32 %v343, %v347
          %v349 = vmul.f32 %v348, 1.442695
          %v350 = vpow.pop %v349
          %352 = vset.pattern.permute.xlu0 0
          %353 = vperm.xlu0 %352, %v347
          %v354 = vpop.permute.xlu0 %353
          %v356 = vsub.f32 %v342, %v354
          %v357 = vmul.f32 %v356, 1.442695
          %v358 = vpow.pop %v357
          %v359 = vsel %vm321, %v358, 0.0
          %360 = vadd.xlane.f32.xlu0 %v359
          %v361 = vpop.xlane.xlu0 %360
          %v362 = vpack.c.bf16 %v358, %v358
          %v363 = vld [vmem:[#allocation3] sm:$0xff]
          %v364 = vmul.f32 %v350, %v363
          %v365 = vadd.f32 %v364, %v361
          %vm366 = vcmask 7168
          %367 = vst.msk [vmem:[#allocation3] sm:$0xff] %vm366, %v365
          %v368 = vld [vmem:[#allocation4] sm:$0xff]
          %370 = vset.pattern.permute.xlu0 0
          %371 = vperm.xlu0 %370, %v350
          %v372 = vpop.permute.xlu0 %371
          %v374 = vmul.f32 %v372, %v368
          %v376 = vunpack.c.l.b16 %v308
          %v377 = vpack.c.b16 %v376, %v376
          %378 = vrot.lane.b32.xlu0 %v377, 96
          %v379 = vpop.permute.xlu0 %378
          %v381 = vsel %vm321, %v362, 0
          %vm383 = vcmask 1043456
          %v385 = vsel %vm383, %v379, 0
          %387 = vmatpush.bf16.msra.mxu0 0
          %388 = vmatpush.bf16.msra.mxu0 0
          %389 = vmatpush.bf16.msra.mxu0 0
          %390 = vmatpush.bf16.msra.mxu0 0
          %391 = vmatpush.bf16.msra.mxu0 0
          %392 = vmatpush.bf16.msra.mxu0 0
          %393 = vmatpush.bf16.msra.mxu0 0
          %394 = vmatpush.bf16.msra.mxu0 %v385
          %395 = vmatmul.bf16.gmra.mxu0 %v381
          %v396 = vpop.f32.mrf.mxu0
          %v397 = vadd.f32 0.0, %v396
          %v398 = vpop.f32.mrf.mxu0
          %399 = vdwg.mxu0
          %v400 = vadd.f32 %v374, %v397
          %401 = vst.msk [vmem:[#allocation4] sm:$0xff] %vm321, %v400
          %402 = vst.msk [vmem:[#allocation2] sm:$0xff] %vm366, %v347
          %v404 = vunpack.c.l.b16 %v307
          %v405 = vpack.c.b16 %v404, %v404
          %406 = vrot.lane.b32.xlu0 %v405, 120
          %v407 = vpop.permute.xlu0 %406
          %408 = vrot.lane.b32.xlu0 %v377, 120
          %v409 = vpop.permute.xlu0 %408
          %v411 = vsel %vm321, %v407, 0
          %v414 = vsel %vm321, %v409, 0
          %416 = vmatpush.bf16.xpose.msra.mxu0 0
          %417 = vmatpush.bf16.xpose.msra.mxu0 0
          %418 = vmatpush.bf16.xpose.msra.mxu0 0
          %419 = vmatpush.bf16.xpose.msra.mxu0 0
          %420 = vmatpush.bf16.xpose.msra.mxu0 0
          %421 = vmatpush.bf16.xpose.msra.mxu0 0
          %422 = vmatpush.bf16.xpose.msra.mxu0 0
          %423 = vmatpush.bf16.xpose.msra.mxu0 %v414
          %424 = vmatmul.bf16.gmra.mxu0 %v411
          %v425 = vpop.f32.mrf.mxu0
          %v426 = vadd.f32 0.0, %v425
          %v427 = vpop.f32.mrf.mxu0
          %428 = vdwg.mxu0
          %v429 = vmul.f32 %v426, 0.35355338
          %v430 = vadd.f32 %v429, %v320
          %s431 = scalar_lea.vmem [#allocation2], 8
          %v432 = vld [vmem:[%s431] sm:$0xff]
          %v433 = vsel %vm321, %v430, -inf
          %434 = vmax.xlane.f32.xlu0 %v433
          %v435 = vpop.xlane.xlu0 %434
          %v436 = vmax.f32 %v432, %v435
          %v437 = vsub.f32 %v432, %v436
          %v438 = vmul.f32 %v437, 1.442695
          %v439 = vpow.pop %v438
          %441 = vset.pattern.permute.xlu0 0
          %442 = vperm.xlu0 %441, %v436
          %v443 = vpop.permute.xlu0 %442
          %v445 = vsub.f32 %v430, %v443
          %v446 = vmul.f32 %v445, 1.442695
          %v447 = vpow.pop %v446
          %v448 = vsel %vm321, %v447, 0.0
          %449 = vadd.xlane.f32.xlu0 %v448
          %v450 = vpop.xlane.xlu0 %449
          %v451 = vpack.c.bf16 %v447, %v447
          %s452 = scalar_lea.vmem [#allocation3], 8
          %v453 = vld [vmem:[%s452] sm:$0xff]
          %v454 = vmul.f32 %v439, %v453
          %v455 = vadd.f32 %v454, %v450
          %456 = vst.msk [vmem:[%s452] sm:$0xff] %vm366, %v455
          %s457 = scalar_lea.vmem [#allocation4], 8
          %v458 = vld [vmem:[%s457] sm:$0xff]
          %460 = vset.pattern.permute.xlu0 0
          %461 = vperm.xlu0 %460, %v439
          %v462 = vpop.permute.xlu0 %461
          %v464 = vmul.f32 %v462, %v458
          %465 = vrot.lane.b32.xlu0 %v377, 88
          %v466 = vpop.permute.xlu0 %465
          %v468 = vsel %vm321, %v451, 0
          %v471 = vsel %vm383, %v466, 0
          %473 = vmatpush.bf16.msra.mxu0 0
          %474 = vmatpush.bf16.msra.mxu0 0
          %475 = vmatpush.bf16.msra.mxu0 0
          %476 = vmatpush.bf16.msra.mxu0 0
          %477 = vmatpush.bf16.msra.mxu0 0
          %478 = vmatpush.bf16.msra.mxu0 0
          %479 = vmatpush.bf16.msra.mxu0 0
          %480 = vmatpush.bf16.msra.mxu0 %v471
          %481 = vmatmul.bf16.gmra.mxu0 %v468
          %v482 = vpop.f32.mrf.mxu0
          %v483 = vadd.f32 0.0, %v482
          %v484 = vpop.f32.mrf.mxu0
          %485 = vdwg.mxu0
          %v486 = vadd.f32 %v464, %v483
          %487 = vst.msk [vmem:[%s457] sm:$0xff] %vm321, %v486
          %488 = vst.msk [vmem:[%s431] sm:$0xff] %vm366, %v436
          %489 = vrot.lane.b32.xlu0 %v405, 112
          %v490 = vpop.permute.xlu0 %489
          %491 = vrot.lane.b32.xlu0 %v377, 112
          %v492 = vpop.permute.xlu0 %491
          %v494 = vsel %vm321, %v490, 0
          %v497 = vsel %vm321, %v492, 0
          %499 = vmatpush.bf16.xpose.msra.mxu0 0
          %500 = vmatpush.bf16.xpose.msra.mxu0 0
          %501 = vmatpush.bf16.xpose.msra.mxu0 0
          %502 = vmatpush.bf16.xpose.msra.mxu0 0
          %503 = vmatpush.bf16.xpose.msra.mxu0 0
          %504 = vmatpush.bf16.xpose.msra.mxu0 0
          %505 = vmatpush.bf16.xpose.msra.mxu0 0
          %506 = vmatpush.bf16.xpose.msra.mxu0 %v497
          %507 = vmatmul.bf16.gmra.mxu0 %v494
          %v508 = vpop.f32.mrf.mxu0
          %v509 = vadd.f32 0.0, %v508
          %v510 = vpop.f32.mrf.mxu0
          %511 = vdwg.mxu0
          %v512 = vmul.f32 %v509, 0.35355338
          %v513 = vadd.f32 %v512, %v320
          %s514 = scalar_lea.vmem [#allocation2], 16
          %v515 = vld [vmem:[%s514] sm:$0xff]
          %v516 = vsel %vm321, %v513, -inf
          %517 = vmax.xlane.f32.xlu0 %v516
          %v518 = vpop.xlane.xlu0 %517
          %v519 = vmax.f32 %v515, %v518
          %v520 = vsub.f32 %v515, %v519
          %v521 = vmul.f32 %v520, 1.442695
          %v522 = vpow.pop %v521
          %524 = vset.pattern.permute.xlu0 0
          %525 = vperm.xlu0 %524, %v519
          %v526 = vpop.permute.xlu0 %525
          %v528 = vsub.f32 %v513, %v526
          %v529 = vmul.f32 %v528, 1.442695
          %v530 = vpow.pop %v529
          %v531 = vsel %vm321, %v530, 0.0
          %532 = vadd.xlane.f32.xlu0 %v531
          %v533 = vpop.xlane.xlu0 %532
          %v534 = vpack.c.bf16 %v530, %v530
          %s535 = scalar_lea.vmem [#allocation3], 16
          %v536 = vld [vmem:[%s535] sm:$0xff]
          %v537 = vmul.f32 %v522, %v536
          %v538 = vadd.f32 %v537, %v533
          %539 = vst.msk [vmem:[%s535] sm:$0xff] %vm366, %v538
          %s540 = scalar_lea.vmem [#allocation4], 16
          %v541 = vld [vmem:[%s540] sm:$0xff]
          %543 = vset.pattern.permute.xlu0 0
          %544 = vperm.xlu0 %543, %v522
          %v545 = vpop.permute.xlu0 %544
          %v547 = vmul.f32 %v545, %v541
          %548 = vrot.lane.b32.xlu0 %v377, 80
          %v549 = vpop.permute.xlu0 %548
          %v551 = vsel %vm321, %v534, 0
          %v554 = vsel %vm383, %v549, 0
          %556 = vmatpush.bf16.msra.mxu0 0
          %557 = vmatpush.bf16.msra.mxu0 0
          %558 = vmatpush.bf16.msra.mxu0 0
          %559 = vmatpush.bf16.msra.mxu0 0
          %560 = vmatpush.bf16.msra.mxu0 0
          %561 = vmatpush.bf16.msra.mxu0 0
          %562 = vmatpush.bf16.msra.mxu0 0
          %563 = vmatpush.bf16.msra.mxu0 %v554
          %564 = vmatmul.bf16.gmra.mxu0 %v551
          %v565 = vpop.f32.mrf.mxu0
          %v566 = vadd.f32 0.0, %v565
          %v567 = vpop.f32.mrf.mxu0
          %568 = vdwg.mxu0
          %v569 = vadd.f32 %v547, %v566
          %570 = vst.msk [vmem:[%s540] sm:$0xff] %vm321, %v569
          %571 = vst.msk [vmem:[%s514] sm:$0xff] %vm366, %v519
          %572 = vrot.lane.b32.xlu0 %v405, 104
          %v573 = vpop.permute.xlu0 %572
          %574 = vrot.lane.b32.xlu0 %v377, 104
          %v575 = vpop.permute.xlu0 %574
          %v577 = vsel %vm321, %v573, 0
          %v580 = vsel %vm321, %v575, 0
          %582 = vmatpush.bf16.xpose.msra.mxu0 0
          %583 = vmatpush.bf16.xpose.msra.mxu0 0
          %584 = vmatpush.bf16.xpose.msra.mxu0 0
          %585 = vmatpush.bf16.xpose.msra.mxu0 0
          %586 = vmatpush.bf16.xpose.msra.mxu0 0
          %587 = vmatpush.bf16.xpose.msra.mxu0 0
          %588 = vmatpush.bf16.xpose.msra.mxu0 0
          %589 = vmatpush.bf16.xpose.msra.mxu0 %v580
          %590 = vmatmul.bf16.gmra.mxu0 %v577
          %v591 = vpop.f32.mrf.mxu0
          %v592 = vadd.f32 0.0, %v591
          %v593 = vpop.f32.mrf.mxu0
          %594 = vdwg.mxu0
          %v595 = vmul.f32 %v592, 0.35355338
          %v596 = vadd.f32 %v595, %v320
          %s597 = scalar_lea.vmem [#allocation2], 24
          %v598 = vld [vmem:[%s597] sm:$0xff]
          %v599 = vsel %vm321, %v596, -inf
          %600 = vmax.xlane.f32.xlu0 %v599
          %v601 = vpop.xlane.xlu0 %600
          %v602 = vmax.f32 %v598, %v601
          %v603 = vsub.f32 %v598, %v602
          %v604 = vmul.f32 %v603, 1.442695
          %v605 = vpow.pop %v604
          %607 = vset.pattern.permute.xlu0 0
          %608 = vperm.xlu0 %607, %v602
          %v609 = vpop.permute.xlu0 %608
          %v611 = vsub.f32 %v596, %v609
          %v612 = vmul.f32 %v611, 1.442695
          %v613 = vpow.pop %v612
          %v614 = vsel %vm321, %v613, 0.0
          %615 = vadd.xlane.f32.xlu0 %v614
          %v616 = vpop.xlane.xlu0 %615
          %v617 = vpack.c.bf16 %v613, %v613
          %s618 = scalar_lea.vmem [#allocation3], 24
          %v619 = vld [vmem:[%s618] sm:$0xff]
          %v620 = vmul.f32 %v605, %v619
          %v621 = vadd.f32 %v620, %v616
          %622 = vst.msk [vmem:[%s618] sm:$0xff] %vm366, %v621
          %s623 = scalar_lea.vmem [#allocation4], 24
          %v624 = vld [vmem:[%s623] sm:$0xff]
          %626 = vset.pattern.permute.xlu0 0
          %627 = vperm.xlu0 %626, %v605
          %v628 = vpop.permute.xlu0 %627
          %v630 = vmul.f32 %v628, %v624
          %631 = vrot.lane.b32.xlu0 %v377, 72
          %v632 = vpop.permute.xlu0 %631
          %v634 = vsel %vm321, %v617, 0
          %v637 = vsel %vm383, %v632, 0
          %639 = vmatpush.bf16.msra.mxu0 0
          %640 = vmatpush.bf16.msra.mxu0 0
          %641 = vmatpush.bf16.msra.mxu0 0
          %642 = vmatpush.bf16.msra.mxu0 0
          %643 = vmatpush.bf16.msra.mxu0 0
          %644 = vmatpush.bf16.msra.mxu0 0
          %645 = vmatpush.bf16.msra.mxu0 0
          %646 = vmatpush.bf16.msra.mxu0 %v637
          %647 = vmatmul.bf16.gmra.mxu0 %v634
          %v648 = vpop.f32.mrf.mxu0
          %v649 = vadd.f32 0.0, %v648
          %v650 = vpop.f32.mrf.mxu0
          %651 = vdwg.mxu0
          %v652 = vadd.f32 %v630, %v649
          %653 = vst.msk [vmem:[%s623] sm:$0xff] %vm321, %v652
          %654 = vst.msk [vmem:[%s597] sm:$0xff] %vm366, %v602
        $region48: #{causal_cross_cond_self_attention.3} parent=35 // pred_fallthru
          _
        // Predicated region
        $region49: #{causal_cross_cond_self_attention.3} parent=35 // pred_check
          %p655 = pneg %p285
        $region50: #{causal_cross_cond_self_attention.3} parent=35 // pred_check_branch
          %657 = sbr.rel (%p655) target = $region52
        $region51: #{causal_cross_cond_self_attention.3} parent=35 // pred_region
          %v658 = vld [vmem:[#allocation3] sm:$0xff]
          %v659 = vrcp.pop %v658
          %v660 = vmul.f32 %v658, %v659
          %v661 = vsub.f32 1.0, %v660
          %v662 = vmul.f32 %v659, %v661
          %v663 = vadd.f32 %v659, %v662
          %vm664 = vweird.f32 %v658
          %vm665 = vweird.f32 %v659
          %vm666 = vmor %vm664, %vm665
          %v667 = vsel %vm666, %v659, %v663
          %v668 = vand.u32 2147483647, %v658
          %vm669 = vcmp.eq.f32.partialorder %v668, 8.507059e+37
          %v670 = vand.u32 %v658, 2147483648
          %v671 = vor.u32 1.1754944e-38, %v670
          %v672 = vsel %vm669, %v671, %v667
          %v673 = vld [vmem:[#allocation4] sm:$0xff]
          %675 = vset.pattern.permute.xlu0 0
          %676 = vperm.xlu0 %675, %v672
          %v677 = vpop.permute.xlu0 %676
          %v679 = vmul.f32 %v673, %v677
          %v680 = vpack.c.bf16 %v679, %v679
          %s681 = scalar_lea.vmem [#allocation3], 8
          %v682 = vld [vmem:[%s681] sm:$0xff]
          %v683 = vrcp.pop %v682
          %v684 = vmul.f32 %v682, %v683
          %v685 = vsub.f32 1.0, %v684
          %v686 = vmul.f32 %v683, %v685
          %v687 = vadd.f32 %v683, %v686
          %vm688 = vweird.f32 %v682
          %vm689 = vweird.f32 %v683
          %vm690 = vmor %vm688, %vm689
          %v691 = vsel %vm690, %v683, %v687
          %v692 = vand.u32 2147483647, %v682
          %vm693 = vcmp.eq.f32.partialorder %v692, 8.507059e+37
          %v694 = vand.u32 %v682, 2147483648
          %v695 = vor.u32 1.1754944e-38, %v694
          %v696 = vsel %vm693, %v695, %v691
          %s697 = scalar_lea.vmem [#allocation4], 8
          %v698 = vld [vmem:[%s697] sm:$0xff]
          %700 = vset.pattern.permute.xlu0 0
          %701 = vperm.xlu0 %700, %v696
          %v702 = vpop.permute.xlu0 %701
          %v704 = vmul.f32 %v698, %v702
          %v705 = vpack.c.bf16 %v704, %v704
          %s706 = scalar_lea.vmem [#allocation3], 16
          %v707 = vld [vmem:[%s706] sm:$0xff]
          %v708 = vrcp.pop %v707
          %v709 = vmul.f32 %v707, %v708
          %v710 = vsub.f32 1.0, %v709
          %v711 = vmul.f32 %v708, %v710
          %v712 = vadd.f32 %v708, %v711
          %vm713 = vweird.f32 %v707
          %vm714 = vweird.f32 %v708
          %vm715 = vmor %vm713, %vm714
          %v716 = vsel %vm715, %v708, %v712
          %v717 = vand.u32 2147483647, %v707
          %vm718 = vcmp.eq.f32.partialorder %v717, 8.507059e+37
          %v719 = vand.u32 %v707, 2147483648
          %v720 = vor.u32 1.1754944e-38, %v719
          %v721 = vsel %vm718, %v720, %v716
          %s722 = scalar_lea.vmem [#allocation4], 16
          %v723 = vld [vmem:[%s722] sm:$0xff]
          %725 = vset.pattern.permute.xlu0 0
          %726 = vperm.xlu0 %725, %v721
          %v727 = vpop.permute.xlu0 %726
          %v729 = vmul.f32 %v723, %v727
          %v730 = vpack.c.bf16 %v729, %v729
          %s731 = scalar_lea.vmem [#allocation3], 24
          %v732 = vld [vmem:[%s731] sm:$0xff]
          %v733 = vrcp.pop %v732
          %v734 = vmul.f32 %v732, %v733
          %v735 = vsub.f32 1.0, %v734
          %v736 = vmul.f32 %v733, %v735
          %v737 = vadd.f32 %v733, %v736
          %vm738 = vweird.f32 %v732
          %vm739 = vweird.f32 %v733
          %vm740 = vmor %vm738, %vm739
          %v741 = vsel %vm740, %v733, %v737
          %v742 = vand.u32 2147483647, %v732
          %vm743 = vcmp.eq.f32.partialorder %v742, 8.507059e+37
          %v744 = vand.u32 %v732, 2147483648
          %v745 = vor.u32 1.1754944e-38, %v744
          %v746 = vsel %vm743, %v745, %v741
          %s747 = scalar_lea.vmem [#allocation4], 24
          %v748 = vld [vmem:[%s747] sm:$0xff]
          %750 = vset.pattern.permute.xlu0 0
          %751 = vperm.xlu0 %750, %v746
          %v752 = vpop.permute.xlu0 %751
          %v754 = vmul.f32 %v748, %v752
          %v755 = vpack.c.bf16 %v754, %v754
          %v757 = vunpack.c.l.b16 %v705
          %v758 = vpack.c.b16 %v757, %v757
          %759 = vrot.lane.b32.xlu0 %v758, 8
          %v760 = vpop.permute.xlu0 %759
          %v762 = vunpack.c.l.b16 %v730
          %v763 = vpack.c.b16 %v762, %v762
          %764 = vrot.lane.b32.xlu0 %v763, 16
          %v765 = vpop.permute.xlu0 %764
          %v767 = vunpack.c.l.b16 %v755
          %v768 = vpack.c.b16 %v767, %v767
          %769 = vrot.lane.b32.xlu0 %v768, 24
          %v770 = vpop.permute.xlu0 %769
          %vm771 = vcmask 64512
          %v774 = vsel %vm771, %v680, %v760
          %vm775 = vcmask 130048
          %v777 = vsel %vm775, %v774, %v765
          %vm778 = vcmask 195584
          %v780 = vsel %vm778, %v777, %v770
          %v781 = vld [vmem:[#allocation5] sm:$0xf]
          %v782 = vld [vmem:[#allocation5 + $0x4] sm:$0xf]
          %v783 = vld [vmem:[#allocation5 + $0x8] sm:$0xf]
          %v784 = vld [vmem:[#allocation5 + $0xc] sm:$0xf]
          %v785 = vld [vmem:[%s3] sm:$0x1]
          %v787 = vperm.slane %v785, 0
          %v793 = vunpack.c.l.b16 %v781
          %v794 = vunpack.c.l.b16 %v782
          %v795 = vunpack.c.l.b16 %v783
          %v796 = vunpack.c.l.b16 %v784
          %v797 = vpack.c.b16 %v794, %v793
          %v798 = vpack.c.b16 %v796, %v795
          %vm801 = vcmask 261120
          %v802 = vsel %vm801, %v780, 0
          %804 = vmatpush.bf16.msra.mxu0 0
          %805 = vmatpush.bf16.msra.mxu0 0
          %806 = vmatpush.bf16.msra.mxu0 0
          %807 = vmatpush.bf16.msra.mxu0 0
          %808 = vmatpush.bf16.msra.mxu0 0
          %809 = vmatpush.bf16.msra.mxu0 0
          %810 = vmatpush.bf16.msra.mxu0 %v798
          %811 = vmatpush.bf16.msra.mxu0 %v797
          %812 = vmatmul.bf16.gmra.mxu0 %v802
          %v813 = vpop.f32.mrf.mxu0
          %v814 = vadd.f32 %v787, %v813
          %v815 = vpop.f32.mrf.mxu0
          %816 = vdwg.mxu0
          %817 = vst.msk [vmem:[%s265] sm:$0xff] %vm801, %v814
        $region52: #{causal_cross_cond_self_attention.3} parent=35 // pred_fallthru
          _
        %s818 = sand.u32 %s150, 1
        %s819 = scalar_lea.sflag [#allocation7], %s818
        %s820 = sand.u32 %s150, 1
        %s821 = smul.addr %s820, 8
        %s822 = scalar_lea.vmem [#allocation8], %s821
        // Predicated region
        $region53: #{causal_cross_cond_self_attention.3} parent=35 // pred_check
          %p823 = pneg %p160
        $region54: #{causal_cross_cond_self_attention.3} parent=35 // pred_check_branch
          %825 = sbr.rel (%p823) target = $region56
        $region55: #{causal_cross_cond_self_attention.3} parent=35 // pred_region
          %827 = vsyncadd %s819, 0
          %s828 = sadd.s32 %s25, %s24
          %s829 = smul.addr %s828, 8
          %s830 = scalar_lea.hbm %s4, %s829
          %s832 = sshll.u32 %s822, 4
          %s833 = int_to_ptr.vmem [resolvable:$true] %s832
          %s834 = sshll.u32 %s830, 4
          %s835 = int_to_ptr.hbm [resolvable:$true] %s834
          %837 = dma.vmem_to_hbm [thread:$0]  %s833, 128, %s835, %s819
        $region56: #{causal_cross_cond_self_attention.3} parent=35 // pred_fallthru
          _
      $region36: #{causal_cross_cond_self_attention.3} parent=5 // pred_fallthru
        _
      %p838 = scmp.le.s32.totalorder 2, %s14
      // Predicated region
      $region57: #{causal_cross_cond_self_attention.3} parent=5 // pred_check
        %p839 = pneg %p838
      $region58: #{causal_cross_cond_self_attention.3} parent=5 // pred_check_branch
        %841 = sbr.rel (%p839) target = $region60
      $region59: #{causal_cross_cond_self_attention.3} parent=5 // pred_region
        %s842 = ssub.s32 %s14, 2
        // Predicated region
        $region61: #{causal_cross_cond_self_attention.3} parent=59 // pred_check
          %p843 = pneg %p166
        $region62: #{causal_cross_cond_self_attention.3} parent=59 // pred_check_branch
          %845 = sbr.rel (%p843) target = $region64
        $region63: #{causal_cross_cond_self_attention.3} parent=59 // pred_region
          %s846 = sand.u32 %s151, 1
          %s847 = scalar_lea.sflag [#allocation7], %s846
          %s848 = sand.u32 %s151, 1
          %s849 = smul.addr %s848, 8
          %s850 = scalar_lea.vmem [#allocation8], %s849
          %852 = dma.done %s847, 128
        $region64: #{causal_cross_cond_self_attention.3} parent=59 // pred_fallthru
          _
      $region60: #{causal_cross_cond_self_attention.3} parent=5 // pred_fallthru
        _
    $region6: #{causal_cross_cond_self_attention.3} parent=1 // loop_footer
      %s18 = sadd.s32 1, %s14
    $region7: #{causal_cross_cond_self_attention.3} parent=1 // loop_footer_branch
      %13 = sbr.rel target = $region3
    $region8: #{causal_cross_cond_self_attention.3} parent=1 // loop_exit
      _
    %853 = vsyncpa [#allocation6], 1
    %s854 = scalar_lea.sflag [#allocation6], 1
    %855 = vsyncpa %s854, 1
    %856 = vsyncpa [#allocation7], 1
    %s857 = scalar_lea.sflag [#allocation7], 1
    %858 = vsyncpa %s857, 1

</llo_original>
